<compile_context>
chip_gen: v7x
topology: tpu7x:2x2x1
jax: 0.10.0
libtpu: 0.0.40
codegen_flags: <defaults>
</compile_context>

<pallas_src>
import math

import jax
import jax.numpy as jnp
from jax.experimental import pallas as pl
from jax.experimental.pallas import tpu as pltpu

LANE = 128


def _round_up(v, m):
    return ((v + m - 1) // m) * m


def _pad2d(a, rows, cols):
    return jnp.pad(a, ((0, rows - a.shape[0]), (0, cols - a.shape[1])))


def ckc_kernel(nb_ref, x_ref, wb_ref, bb_ref,
               w1_ref, b1_ref, w2_ref, b2_ref, w3_ref, b3_ref, w4_ref, b4_ref,
               out_ref):
    nb = nb_ref[0]                                    # scalar int32 (SMEM)

    # ---- backbone: average pool is pre-folded into wb_ref -> single matmul ----
    out1 = jnp.dot(x_ref[...], wb_ref[...],
                   preferred_element_type=jnp.float32) + bb_ref[...]   # (TN, K) f32

    tn, k = out1.shape

    # ---- get_winners: argmax over K + neighborhood amplitude mask ----
    j = jax.lax.broadcasted_iota(jnp.int32, (tn, k), 1)
    max_val = jnp.max(out1, axis=1, keepdims=True)
    # first index achieving the max (argmax tie-break = first occurrence)
    w = jnp.min(jnp.where(out1 == max_val, j, k), axis=1, keepdims=True)  # (TN, 1)

    d = jnp.abs(j - w)
    # interior neighbors j = winner +/- d (for j < winner we need j > 0,
    # matching `winners_prev *= winners_prev > 0` in get_winners)
    interior = (d >= 1) & (d <= nb - 1) & (j > 0)
    # index 0 is repeatedly clamped-to when winner - n_idx <= 0; the last
    # write (largest n_idx = nb - 1) wins, so it carries the amplitude of
    # distance nb - 1.  (w > 0) & (w <= nb - 1) is impossible for nb == 1, so
    # no explicit nb > 1 guard is needed.
    edge0 = (j == 0) & (w > 0) & (w <= nb - 1)

    d_eff = jnp.where(edge0, nb - 1, d)
    d_f = jnp.maximum(d_eff.astype(jnp.float32), 1.0)   # d == 0 is the winner;
    amp = 1.0 - jnp.exp(-4.0 / d_f)                      # its value is overwritten below
    val = jnp.where(interior | edge0, amp, 0.0)
    winner_nodes = jnp.where(j == w, 1.0, val)

    h = (winner_nodes * out1).astype(jnp.bfloat16)       # masked Kohonen output

    # ---- FeedforwardNet: fc1/relu fc2/relu fc3/relu fc4 (all 128-lane padded) ----
    h = jnp.maximum(jnp.dot(h, w1_ref[...], preferred_element_type=jnp.float32)
                    + b1_ref[...], 0.0).astype(jnp.bfloat16)
    h = jnp.maximum(jnp.dot(h, w2_ref[...], preferred_element_type=jnp.float32)
                    + b2_ref[...], 0.0).astype(jnp.bfloat16)
    h = jnp.maximum(jnp.dot(h, w3_ref[...], preferred_element_type=jnp.float32)
                    + b3_ref[...], 0.0).astype(jnp.bfloat16)
    out_ref[...] = jnp.dot(h, w4_ref[...], preferred_element_type=jnp.float32) + b4_ref[...]


def prepare_params(params, spatial):
    """One-time host-side prep: fold the average pool into the backbone weight,
    zero-pad the FFN to 128 lanes, cast matmul operands to bf16."""
    wb, bb = params["wb"], params["bb"]                  # (C, K), (1, K)
    c, k = wb.shape
    assert k % LANE == 0, "kohonen_dim must be a multiple of 128"

    # x2d (N, C*HW) @ repeat(wb / HW, HW, axis=0)  ==  mean_spatial(x) @ wb
    wb_full = jnp.repeat(wb / float(spatial), spatial, axis=0)   # (C*HW, K)

    hid = params["w1"].shape[1]
    ncls = params["w4"].shape[1]
    hid_p = _round_up(hid, LANE)
    ncls_p = _round_up(ncls, LANE)

    prepped = dict(
        wb=wb_full.astype(jnp.bfloat16),
        bb=bb.astype(jnp.float32),
        w1=_pad2d(params["w1"], k, hid_p).astype(jnp.bfloat16),
        b1=_pad2d(params["b1"], 1, hid_p).astype(jnp.float32),
        w2=_pad2d(params["w2"], hid_p, hid_p).astype(jnp.bfloat16),
        b2=_pad2d(params["b2"], 1, hid_p).astype(jnp.float32),
        w3=_pad2d(params["w3"], hid_p, hid_p).astype(jnp.bfloat16),
        b3=_pad2d(params["b3"], 1, hid_p).astype(jnp.float32),
        w4=_pad2d(params["w4"], hid_p, ncls_p).astype(jnp.bfloat16),
        b4=_pad2d(params["b4"], 1, ncls_p).astype(jnp.float32),
    )
    return prepped, ncls, ncls_p


def ckc_net_forward(x1, prepped, num_classes, num_classes_pad, *, neighbor_idx):
    n, c, hh, ww = x1.shape
    chw = c * hh * ww

    x2d = x1.reshape(n, chw).astype(jnp.bfloat16)

    # Batch tile: multiple of 16 (bf16 sublane packing), up to 128 rows/step.
    tn = min(128, _round_up(n, 16))
    n_pad = _round_up(n, tn)
    if n_pad != n:
        x2d = jnp.pad(x2d, ((0, n_pad - n), (0, 0)))
    grid = (n_pad // tn,)

    nb = jnp.asarray([neighbor_idx], dtype=jnp.int32)    # scalar prefetch (SMEM)

    x_spec = pl.BlockSpec((tn, chw), lambda i, nb_ref: (i, 0))
    out_spec = pl.BlockSpec((tn, num_classes_pad), lambda i, nb_ref: (i, 0))

    def _full(arr):
        return pl.BlockSpec(arr.shape, lambda i, nb_ref: (0,) * arr.ndim)

    weight_order = ("wb", "bb", "w1", "b1", "w2", "b2", "w3", "b3", "w4", "b4")
    weight_args = tuple(prepped[name] for name in weight_order)

    # VMEM budget: double-buffered x/out tiles + resident weights, with slack;
    # kept well under v7x's 64 MiB physical VMEM.
    weight_bytes = sum(int(a.size) * a.dtype.itemsize for a in weight_args)
    tile_bytes = 2 * (tn * chw * 2 + tn * num_classes_pad * 4)
    vmem_limit = int(min(max(4 * (tile_bytes + weight_bytes), 8 << 20), 48 << 20))

    out = pl.pallas_call(
        ckc_kernel,
        out_shape=jax.ShapeDtypeStruct((n_pad, num_classes_pad), jnp.float32),
        grid_spec=pltpu.PrefetchScalarGridSpec(
            num_scalar_prefetch=1,
            grid=grid,
            in_specs=[x_spec] + [_full(a) for a in weight_args],
            out_specs=out_spec,
        ),
        compiler_params=pltpu.CompilerParams(
            dimension_semantics=("parallel",),
            vmem_limit_bytes=vmem_limit,
        ),
    )(nb, x2d, *weight_args)

    return out[:n, :num_classes]


if __name__ == "__main__":
    # Module hyper-parameters (small, consistent with __init__ constraints).
    num_classes = 8
    kohonen_dim = 128          # assert num_classes < kohonen_dim
    hidden_units = 32
    num_epochs = 10
    max_num_neighbors = 4
    epoch = 0
    neighbors_map = [1 + max_num_neighbors * (num_epochs - 1 - e) // num_epochs
                     for e in range(num_epochs)]
    nb = neighbors_map[epoch]  # neighbor_idx passed to get_winners

    # Deterministic inputs / parameters.
    key = jax.random.PRNGKey(0)
    ks = jax.random.split(key, 12)
    N, C, H, W = 2, 4, 16, 16
    x1 = jax.random.normal(ks[0], (N, C, H, W), jnp.float32)

    def lin(kw, kb, fin, fout):
        scale = 1.0 / math.sqrt(fin)
        wt = jax.random.uniform(kw, (fin, fout), jnp.float32, -scale, scale)
        b = jax.random.uniform(kb, (1, fout), jnp.float32, -scale, scale)
        return wt, b

    wb, bb = lin(ks[1], ks[2], C, kohonen_dim)             # synthetic backbone head
    w1, b1 = lin(ks[3], ks[4], kohonen_dim, hidden_units)  # fc1
    w2, b2 = lin(ks[5], ks[6], hidden_units, hidden_units) # fc2
    w3, b3 = lin(ks[7], ks[8], hidden_units, hidden_units) # fc3
    w4, b4 = lin(ks[9], ks[10], hidden_units, num_classes) # fc4
    params = dict(wb=wb, bb=bb, w1=w1, b1=b1, w2=w2, b2=b2,
                  w3=w3, b3=b3, w4=w4, b4=b4)

    # One-time parameter prep (pool folding, 128-lane padding, bf16 cast).
    prepped, ncls, ncls_p = prepare_params(params, H * W)

    out = ckc_net_forward(x1, prepped, ncls, ncls_p, neighbor_idx=nb)
    jax.block_until_ready(out)
    assert out.shape == (N, num_classes)
    assert bool(jnp.all(jnp.isfinite(out)))
    print("KERNEL_OK")
</pallas_src>

<mosaic_0001>
module attributes {stable_mosaic.version = 11 : i64} {
  func.func @ckc_kernel(%arg0: i32, %arg1: memref<1xi32, #tpu.memory_space<smem>>, %arg2: memref<16x1024xbf16, #tpu.memory_space<vmem>>, %arg3: memref<1024x128xbf16, #tpu.memory_space<vmem>>, %arg4: memref<1x128xf32, #tpu.memory_space<vmem>>, %arg5: memref<128x128xbf16, #tpu.memory_space<vmem>>, %arg6: memref<1x128xf32, #tpu.memory_space<vmem>>, %arg7: memref<128x128xbf16, #tpu.memory_space<vmem>>, %arg8: memref<1x128xf32, #tpu.memory_space<vmem>>, %arg9: memref<128x128xbf16, #tpu.memory_space<vmem>>, %arg10: memref<1x128xf32, #tpu.memory_space<vmem>>, %arg11: memref<128x128xbf16, #tpu.memory_space<vmem>>, %arg12: memref<1x128xf32, #tpu.memory_space<vmem>>, %arg13: memref<16x128xf32, #tpu.memory_space<vmem>>) attributes {dimension_semantics = [#tpu.dimension_semantics<parallel>], iteration_bounds = array<i64: 1>, scalar_prefetch = 1 : i64, scratch_operands = 0 : i64, tpu.core_type = #tpu.core_type<tc>, window_params = [{transform_indices = @transform_0, window_bounds = array<i64: 16, 1024>}, {pipeline_mode = #tpu.pipeline_mode<synchronous>, transform_indices = @transform_1, window_bounds = array<i64: 1024, 128>}, {pipeline_mode = #tpu.pipeline_mode<synchronous>, transform_indices = @transform_2, window_bounds = array<i64: 1, 128>}, {pipeline_mode = #tpu.pipeline_mode<synchronous>, transform_indices = @transform_3, window_bounds = array<i64: 128, 128>}, {pipeline_mode = #tpu.pipeline_mode<synchronous>, transform_indices = @transform_4, window_bounds = array<i64: 1, 128>}, {pipeline_mode = #tpu.pipeline_mode<synchronous>, transform_indices = @transform_5, window_bounds = array<i64: 128, 128>}, {pipeline_mode = #tpu.pipeline_mode<synchronous>, transform_indices = @transform_6, window_bounds = array<i64: 1, 128>}, {pipeline_mode = #tpu.pipeline_mode<synchronous>, transform_indices = @transform_7, window_bounds = array<i64: 128, 128>}, {pipeline_mode = #tpu.pipeline_mode<synchronous>, transform_indices = @transform_8, window_bounds = array<i64: 1, 128>}, {pipeline_mode = #tpu.pipeline_mode<synchronous>, transform_indices = @transform_9, window_bounds = array<i64: 128, 128>}, {pipeline_mode = #tpu.pipeline_mode<synchronous>, transform_indices = @transform_10, window_bounds = array<i64: 1, 128>}, {transform_indices = @transform_11, window_bounds = array<i64: 16, 128>}]} {
    %c0 = arith.constant 0 : index
    %0 = memref.load %arg1[%c0] : memref<1xi32, #tpu.memory_space<smem>>
    %c0_0 = arith.constant 0 : index
    %c0_1 = arith.constant 0 : index
    %1 = vector.load %arg2[%c0_0, %c0_1] : memref<16x1024xbf16, #tpu.memory_space<vmem>>, vector<16x1024xbf16>
    %c0_2 = arith.constant 0 : index
    %c0_3 = arith.constant 0 : index
    %2 = vector.load %arg3[%c0_2, %c0_3] : memref<1024x128xbf16, #tpu.memory_space<vmem>>, vector<1024x128xbf16>
    %cst = arith.constant dense<0.000000e+00> : vector<16x128xf32>
    %3 = tpu.matmul %1, %2, %cst {dimension_numbers = #tpu.dot_dimension_numbers<[1], [0], [0], [1], [0, 0, 1, 1], [], []>} : vector<16x1024xbf16>, vector<1024x128xbf16>, vector<16x128xf32> -> vector<16x128xf32>
    %c0_4 = arith.constant 0 : index
    %c0_5 = arith.constant 0 : index
    %4 = vector.load %arg4[%c0_4, %c0_5] : memref<1x128xf32, #tpu.memory_space<vmem>>, vector<1x128xf32>
    %5 = vector.broadcast %4 : vector<1x128xf32> to vector<16x128xf32>
    %6 = arith.addf %3, %5 : vector<16x128xf32>
    %7 = tpu.iota {dimensions = array<i32: 1>} : vector<16x128xi32>
    %cst_6 = arith.constant dense<0xFF800000> : vector<16xf32>
    %8 = vector.multi_reduction <maximumf>, %6, %cst_6 [1] : vector<16x128xf32> to vector<16xf32>
    %9 = vector.shape_cast %8 : vector<16xf32> to vector<16x1xf32>
    %10 = vector.broadcast %9 : vector<16x1xf32> to vector<16x128xf32>
    %11 = arith.cmpf oeq, %6, %10 : vector<16x128xf32>
    %c128_i32 = arith.constant 128 : i32
    %12 = vector.broadcast %c128_i32 : i32 to vector<16x128xi32>
    %13 = arith.select %11, %7, %12 : vector<16x128xi1>, vector<16x128xi32>
    %cst_7 = arith.constant dense<2147483647> : vector<16xi32>
    %14 = vector.multi_reduction <minsi>, %13, %cst_7 [1] : vector<16x128xi32> to vector<16xi32>
    %15 = vector.shape_cast %14 : vector<16xi32> to vector<16x1xi32>
    %16 = vector.broadcast %15 : vector<16x1xi32> to vector<16x128xi32>
    %17 = arith.subi %7, %16 : vector<16x128xi32>
    %18 = math.absi %17 : vector<16x128xi32>
    %c1_i32 = arith.constant 1 : i32
    %19 = vector.broadcast %c1_i32 : i32 to vector<16x128xi32>
    %20 = arith.cmpi sge, %18, %19 : vector<16x128xi32>
    %c1_i32_8 = arith.constant 1 : i32
    %21 = arith.subi %0, %c1_i32_8 : i32
    %22 = vector.broadcast %21 : i32 to vector<16x128xi32>
    %23 = arith.cmpi sle, %18, %22 : vector<16x128xi32>
    %24 = arith.andi %20, %23 : vector<16x128xi1>
    %c0_i32 = arith.constant 0 : i32
    %25 = vector.broadcast %c0_i32 : i32 to vector<16x128xi32>
    %26 = arith.cmpi sgt, %7, %25 : vector<16x128xi32>
    %27 = arith.andi %24, %26 : vector<16x128xi1>
    %c0_i32_9 = arith.constant 0 : i32
    %28 = vector.broadcast %c0_i32_9 : i32 to vector<16x128xi32>
    %29 = arith.cmpi eq, %7, %28 : vector<16x128xi32>
    %c0_i32_10 = arith.constant 0 : i32
    %30 = vector.broadcast %c0_i32_10 : i32 to vector<16x1xi32>
    %31 = arith.cmpi sgt, %15, %30 : vector<16x1xi32>
    %32 = vector.broadcast %31 : vector<16x1xi1> to vector<16x128xi1>
    %33 = arith.andi %29, %32 : vector<16x128xi1>
    %c1_i32_11 = arith.constant 1 : i32
    %34 = arith.subi %0, %c1_i32_11 : i32
    %35 = vector.broadcast %34 : i32 to vector<16x1xi32>
    %36 = arith.cmpi sle, %15, %35 : vector<16x1xi32>
    %37 = vector.broadcast %36 : vector<16x1xi1> to vector<16x128xi1>
    %38 = arith.andi %33, %37 : vector<16x128xi1>
    %c1_i32_12 = arith.constant 1 : i32
    %39 = arith.subi %0, %c1_i32_12 : i32
    %40 = vector.broadcast %39 : i32 to vector<16x128xi32>
    %41 = arith.select %38, %40, %18 : vector<16x128xi1>, vector<16x128xi32>
    %42 = arith.sitofp %41 : vector<16x128xi32> to vector<16x128xf32>
    %cst_13 = arith.constant 1.000000e+00 : f32
    %43 = vector.broadcast %cst_13 : f32 to vector<16x128xf32>
    %44 = arith.maximumf %42, %43 : vector<16x128xf32>
    %cst_14 = arith.constant -4.000000e+00 : f32
    %45 = vector.broadcast %cst_14 : f32 to vector<16x128xf32>
    %46 = arith.divf %45, %44 : vector<16x128xf32>
    %47 = math.exp %46 : vector<16x128xf32>
    %cst_15 = arith.constant 1.000000e+00 : f32
    %48 = vector.broadcast %cst_15 : f32 to vector<16x128xf32>
    %49 = arith.subf %48, %47 : vector<16x128xf32>
    %50 = arith.ori %27, %38 : vector<16x128xi1>
    %cst_16 = arith.constant 0.000000e+00 : f32
    %51 = vector.broadcast %cst_16 : f32 to vector<16x128xf32>
    %52 = arith.select %50, %49, %51 : vector<16x128xi1>, vector<16x128xf32>
    %53 = vector.broadcast %15 : vector<16x1xi32> to vector<16x128xi32>
    %54 = arith.cmpi eq, %7, %53 : vector<16x128xi32>
    %cst_17 = arith.constant 1.000000e+00 : f32
    %55 = vector.broadcast %cst_17 : f32 to vector<16x128xf32>
    %56 = arith.select %54, %55, %52 : vector<16x128xi1>, vector<16x128xf32>
    %57 = arith.mulf %56, %6 : vector<16x128xf32>
    %58 = arith.truncf %57 : vector<16x128xf32> to vector<16x128xbf16>
    %c0_18 = arith.constant 0 : index
    %c0_19 = arith.constant 0 : index
    %59 = vector.load %arg5[%c0_18, %c0_19] : memref<128x128xbf16, #tpu.memory_space<vmem>>, vector<128x128xbf16>
    %cst_20 = arith.constant dense<0.000000e+00> : vector<16x128xf32>
    %60 = tpu.matmul %58, %59, %cst_20 {dimension_numbers = #tpu.dot_dimension_numbers<[1], [0], [0], [1], [0, 0, 1, 1], [], []>} : vector<16x128xbf16>, vector<128x128xbf16>, vector<16x128xf32> -> vector<16x128xf32>
    %c0_21 = arith.constant 0 : index
    %c0_22 = arith.constant 0 : index
    %61 = vector.load %arg6[%c0_21, %c0_22] : memref<1x128xf32, #tpu.memory_space<vmem>>, vector<1x128xf32>
    %62 = vector.broadcast %61 : vector<1x128xf32> to vector<16x128xf32>
    %63 = arith.addf %60, %62 : vector<16x128xf32>
    %cst_23 = arith.constant 0.000000e+00 : f32
    %64 = vector.broadcast %cst_23 : f32 to vector<16x128xf32>
    %65 = arith.maximumf %63, %64 : vector<16x128xf32>
    %66 = arith.truncf %65 : vector<16x128xf32> to vector<16x128xbf16>
    %c0_24 = arith.constant 0 : index
    %c0_25 = arith.constant 0 : index
    %67 = vector.load %arg7[%c0_24, %c0_25] : memref<128x128xbf16, #tpu.memory_space<vmem>>, vector<128x128xbf16>
    %cst_26 = arith.constant dense<0.000000e+00> : vector<16x128xf32>
    %68 = tpu.matmul %66, %67, %cst_26 {dimension_numbers = #tpu.dot_dimension_numbers<[1], [0], [0], [1], [0, 0, 1, 1], [], []>} : vector<16x128xbf16>, vector<128x128xbf16>, vector<16x128xf32> -> vector<16x128xf32>
    %c0_27 = arith.constant 0 : index
    %c0_28 = arith.constant 0 : index
    %69 = vector.load %arg8[%c0_27, %c0_28] : memref<1x128xf32, #tpu.memory_space<vmem>>, vector<1x128xf32>
    %70 = vector.broadcast %69 : vector<1x128xf32> to vector<16x128xf32>
    %71 = arith.addf %68, %70 : vector<16x128xf32>
    %cst_29 = arith.constant 0.000000e+00 : f32
    %72 = vector.broadcast %cst_29 : f32 to vector<16x128xf32>
    %73 = arith.maximumf %71, %72 : vector<16x128xf32>
    %74 = arith.truncf %73 : vector<16x128xf32> to vector<16x128xbf16>
    %c0_30 = arith.constant 0 : index
    %c0_31 = arith.constant 0 : index
    %75 = vector.load %arg9[%c0_30, %c0_31] : memref<128x128xbf16, #tpu.memory_space<vmem>>, vector<128x128xbf16>
    %cst_32 = arith.constant dense<0.000000e+00> : vector<16x128xf32>
    %76 = tpu.matmul %74, %75, %cst_32 {dimension_numbers = #tpu.dot_dimension_numbers<[1], [0], [0], [1], [0, 0, 1, 1], [], []>} : vector<16x128xbf16>, vector<128x128xbf16>, vector<16x128xf32> -> vector<16x128xf32>
    %c0_33 = arith.constant 0 : index
    %c0_34 = arith.constant 0 : index
    %77 = vector.load %arg10[%c0_33, %c0_34] : memref<1x128xf32, #tpu.memory_space<vmem>>, vector<1x128xf32>
    %78 = vector.broadcast %77 : vector<1x128xf32> to vector<16x128xf32>
    %79 = arith.addf %76, %78 : vector<16x128xf32>
    %cst_35 = arith.constant 0.000000e+00 : f32
    %80 = vector.broadcast %cst_35 : f32 to vector<16x128xf32>
    %81 = arith.maximumf %79, %80 : vector<16x128xf32>
    %82 = arith.truncf %81 : vector<16x128xf32> to vector<16x128xbf16>
    %c0_36 = arith.constant 0 : index
    %c0_37 = arith.constant 0 : index
    %83 = vector.load %arg11[%c0_36, %c0_37] : memref<128x128xbf16, #tpu.memory_space<vmem>>, vector<128x128xbf16>
    %cst_38 = arith.constant dense<0.000000e+00> : vector<16x128xf32>
    %84 = tpu.matmul %82, %83, %cst_38 {dimension_numbers = #tpu.dot_dimension_numbers<[1], [0], [0], [1], [0, 0, 1, 1], [], []>} : vector<16x128xbf16>, vector<128x128xbf16>, vector<16x128xf32> -> vector<16x128xf32>
    %c0_39 = arith.constant 0 : index
    %c0_40 = arith.constant 0 : index
    %85 = vector.load %arg12[%c0_39, %c0_40] : memref<1x128xf32, #tpu.memory_space<vmem>>, vector<1x128xf32>
    %86 = vector.broadcast %85 : vector<1x128xf32> to vector<16x128xf32>
    %87 = arith.addf %84, %86 : vector<16x128xf32>
    %c0_41 = arith.constant 0 : index
    %c0_42 = arith.constant 0 : index
    %88 = vector.load %arg13[%c0_41, %c0_42] : memref<16x128xf32, #tpu.memory_space<vmem>>, vector<16x128xf32>
    tpu.vector_store %arg13[%c0_41, %c0_42], %87 {strides = array<i32>} : memref<16x128xf32, #tpu.memory_space<vmem>>, vector<16x128xf32>,
    return
  }
  func.func @transform_0(%arg0: i32, %arg1: memref<1xi32, #tpu.memory_space<smem>>) -> (i32, i32) {
    %c0_i32 = arith.constant 0 : i32
    %c0_i32_0 = arith.constant 0 : i32
    return %arg0, %c0_i32 : i32, i32
  }
  func.func @transform_1(%arg0: i32, %arg1: memref<1xi32, #tpu.memory_space<smem>>) -> (i32, i32) {
    %c0_i32 = arith.constant 0 : i32
    %c0_i32_0 = arith.constant 0 : i32
    %c0_i32_1 = arith.constant 0 : i32
    return %c0_i32, %c0_i32_0 : i32, i32
  }
  func.func @transform_2(%arg0: i32, %arg1: memref<1xi32, #tpu.memory_space<smem>>) -> (i32, i32) {
    %c0_i32 = arith.constant 0 : i32
    %c0_i32_0 = arith.constant 0 : i32
    %c0_i32_1 = arith.constant 0 : i32
    return %c0_i32, %c0_i32_0 : i32, i32
  }
  func.func @transform_3(%arg0: i32, %arg1: memref<1xi32, #tpu.memory_space<smem>>) -> (i32, i32) {
    %c0_i32 = arith.constant 0 : i32
    %c0_i32_0 = arith.constant 0 : i32
    %c0_i32_1 = arith.constant 0 : i32
    return %c0_i32, %c0_i32_0 : i32, i32
  }
  func.func @transform_4(%arg0: i32, %arg1: memref<1xi32, #tpu.memory_space<smem>>) -> (i32, i32) {
    %c0_i32 = arith.constant 0 : i32
    %c0_i32_0 = arith.constant 0 : i32
    %c0_i32_1 = arith.constant 0 : i32
    return %c0_i32, %c0_i32_0 : i32, i32
  }
  func.func @transform_5(%arg0: i32, %arg1: memref<1xi32, #tpu.memory_space<smem>>) -> (i32, i32) {
    %c0_i32 = arith.constant 0 : i32
    %c0_i32_0 = arith.constant 0 : i32
    %c0_i32_1 = arith.constant 0 : i32
    return %c0_i32, %c0_i32_0 : i32, i32
  }
  func.func @transform_6(%arg0: i32, %arg1: memref<1xi32, #tpu.memory_space<smem>>) -> (i32, i32) {
    %c0_i32 = arith.constant 0 : i32
    %c0_i32_0 = arith.constant 0 : i32
    %c0_i32_1 = arith.constant 0 : i32
    return %c0_i32, %c0_i32_0 : i32, i32
  }
  func.func @transform_7(%arg0: i32, %arg1: memref<1xi32, #tpu.memory_space<smem>>) -> (i32, i32) {
    %c0_i32 = arith.constant 0 : i32
    %c0_i32_0 = arith.constant 0 : i32
    %c0_i32_1 = arith.constant 0 : i32
    return %c0_i32, %c0_i32_0 : i32, i32
  }
  func.func @transform_8(%arg0: i32, %arg1: memref<1xi32, #tpu.memory_space<smem>>) -> (i32, i32) {
    %c0_i32 = arith.constant 0 : i32
    %c0_i32_0 = arith.constant 0 : i32
    %c0_i32_1 = arith.constant 0 : i32
    return %c0_i32, %c0_i32_0 : i32, i32
  }
  func.func @transform_9(%arg0: i32, %arg1: memref<1xi32, #tpu.memory_space<smem>>) -> (i32, i32) {
    %c0_i32 = arith.constant 0 : i32
    %c0_i32_0 = arith.constant 0 : i32
    %c0_i32_1 = arith.constant 0 : i32
    return %c0_i32, %c0_i32_0 : i32, i32
  }
  func.func @transform_10(%arg0: i32, %arg1: memref<1xi32, #tpu.memory_space<smem>>) -> (i32, i32) {
    %c0_i32 = arith.constant 0 : i32
    %c0_i32_0 = arith.constant 0 : i32
    %c0_i32_1 = arith.constant 0 : i32
    return %c0_i32, %c0_i32_0 : i32, i32
  }
  func.func @transform_11(%arg0: i32, %arg1: memref<1xi32, #tpu.memory_space<smem>>) -> (i32, i32) {
    %c0_i32 = arith.constant 0 : i32
    %c0_i32_0 = arith.constant 0 : i32
    return %arg0, %c0_i32 : i32, i32
  }
}

</mosaic_0001>

<llo_original>
// kernel: tpu_custom_call.1
$region0: #{tpu_custom_call.1}
  #allocation0 [shape = 'u32[]', space=smem, size = 0x4, offset = 0x4, fixed_abs, tag = 'smem constant byte address 0x4 - core index']
  #allocation1 [shape = 'u32[144,128]{1,0:T(1,128)}', space=vmem, size = 0x12000, scoped, tag = 'internal scratch']
  #allocation2 [shape = 's32[1]{0}', space=sflag, size = 0x4, scoped, tag = 'scoped memory for tpu_custom_call.1']
  #allocation3 [shape = 's32[1]{0:T(128)S(6)}', space=smem, size = 0x200, scoped, tag = 'prefetched SMEM operand 0']
  %s0 = inlined_call_operand.<no memory space> [shape: s32[1], index: 0, kind: input, shape index: {}]
  %s1 = inlined_call_operand.hbm [shape: bf16[16,1024], index: 1, kind: input, shape index: {}]
  %s2 = inlined_call_operand.hbm [shape: bf16[1024,128], index: 2, kind: input, shape index: {}]
  %s3 = inlined_call_operand.vmem [shape: f32[1,128], index: 3, kind: input, shape index: {}]
  %s4 = inlined_call_operand.hbm [shape: bf16[128,128], index: 4, kind: input, shape index: {}]
  %s5 = inlined_call_operand.vmem [shape: f32[1,128], index: 5, kind: input, shape index: {}]
  %s6 = inlined_call_operand.hbm [shape: bf16[128,128], index: 6, kind: input, shape index: {}]
  %s7 = inlined_call_operand.vmem [shape: f32[1,128], index: 7, kind: input, shape index: {}]
  %s8 = inlined_call_operand.hbm [shape: bf16[128,128], index: 8, kind: input, shape index: {}]
  %s9 = inlined_call_operand.vmem [shape: f32[1,128], index: 9, kind: input, shape index: {}]
  %s10 = inlined_call_operand.hbm [shape: bf16[128,128], index: 10, kind: input, shape index: {}]
  %s11 = inlined_call_operand.vmem [shape: f32[1,128], index: 11, kind: input, shape index: {}]
  %s12 = inlined_call_operand.hbm [shape: f32[16,128], index: 12, kind: output, shape index: {}]
  %s13 = sld [smem:[#allocation0]]
  $region78: #{tpu_custom_call.1} parent=0
    _
  %s15 = ssub.s32 1, %s13
  %s16 = scalar_select 0, %s15, %s13
  %17 = sst [smem:[#allocation3]] %s0
  $region1: #{tpu_custom_call.1} parent=0
    #allocation4 [shape = 'u8[32768]{0}', space=vmem, size = 0x8000, scoped, tag = 'input window, operand 1, single buffered']
    #allocation5 [shape = 's32[1]{0}', space=sflag, size = 0x4, scoped, tag = 'scoped memory for tpu_custom_call.1']
    #allocation6 [shape = 's32[1]{0}', space=sflag, size = 0x4, scoped, tag = 'scoped memory for tpu_custom_call.1']
    #allocation7 [shape = 'u8[262144]{0}', space=vmem, size = 0x40000, scoped, tag = 'input window, operand 2, single buffered']
    #allocation8 [shape = 's32[1]{0}', space=sflag, size = 0x4, scoped, tag = 'scoped memory for tpu_custom_call.1']
    #allocation9 [shape = 'u8[32768]{0}', space=vmem, size = 0x8000, scoped, tag = 'input window, operand 4, single buffered']
    #allocation10 [shape = 'u8[32768]{0}', space=vmem, size = 0x8000, scoped, tag = 'input window, operand 6, single buffered']
    #allocation11 [shape = 's32[1]{0}', space=sflag, size = 0x4, scoped, tag = 'scoped memory for tpu_custom_call.1']
    #allocation12 [shape = 'u8[32768]{0}', space=vmem, size = 0x8000, scoped, tag = 'input window, operand 8, single buffered']
    #allocation13 [shape = 'u8[32768]{0}', space=vmem, size = 0x8000, scoped, tag = 'input window, operand 10, single buffered']
    #allocation14 [shape = 's32[1]{0}', space=sflag, size = 0x4, scoped, tag = 'scoped memory for tpu_custom_call.1']
    #allocation15 [shape = 'u8[8192]{0}', space=vmem, size = 0x2000, scoped, tag = 'output window, operand 0, single buffered']
    %18 = vsyncpa [#allocation5], 0
    %19 = vsyncpa [#allocation8], 0
    %20 = vsyncpa [#allocation11], 0
    %21 = vsyncpa [#allocation14], 0
    %22 = vsyncpa [#allocation6], 0
    // Predicated region
    $region2: #{tpu_custom_call.1} parent=1 // pred_check
      _
    $region3: #{tpu_custom_call.1} parent=1 // pred_check_branch
      %24 = sbr.rel (0) target = $region5
    $region4: #{tpu_custom_call.1} parent=1 // pred_region
      %s26 = ssub.s32 1024, 1024
      %27 = vsyncadd [#allocation5], %s26
      %s28 = sshll.u32 [#allocation4], 4
      %s29 = int_to_ptr.vmem [resolvable:$true] %s28
      %34 = dma.hbm_to_vmem [thread:$0]  %s1, 1024, %s29, [#allocation5], 512, 512, 32
    $region5: #{tpu_custom_call.1} parent=1 // pred_fallthru
      _
    // Predicated region
    $region6: #{tpu_custom_call.1} parent=1 // pred_check
      _
    $region7: #{tpu_custom_call.1} parent=1 // pred_check_branch
      %36 = sbr.rel (0) target = $region9
    $region8: #{tpu_custom_call.1} parent=1 // pred_region
      %s38 = ssub.s32 8192, 8192
      %39 = vsyncadd [#allocation8], %s38
      %s40 = sshll.u32 [#allocation7], 4
      %s41 = int_to_ptr.vmem [resolvable:$true] %s40
      %46 = dma.hbm_to_vmem [thread:$0]  %s2, 8192, %s41, [#allocation8], 64, 64, 4
    $region9: #{tpu_custom_call.1} parent=1 // pred_fallthru
      _
    // Predicated region
    $region10: #{tpu_custom_call.1} parent=1 // pred_check
      _
    $region11: #{tpu_custom_call.1} parent=1 // pred_check_branch
      %48 = sbr.rel (0) target = $region13
    $region12: #{tpu_custom_call.1} parent=1 // pred_region
      _
    $region13: #{tpu_custom_call.1} parent=1 // pred_fallthru
      _
    // Predicated region
    $region14: #{tpu_custom_call.1} parent=1 // pred_check
      _
    $region15: #{tpu_custom_call.1} parent=1 // pred_check_branch
      %50 = sbr.rel (0) target = $region17
    $region16: #{tpu_custom_call.1} parent=1 // pred_region
      %s52 = ssub.s32 1024, 1024
      %53 = vsyncadd [#allocation8], %s52
      %s54 = sshll.u32 [#allocation9], 4
      %s55 = int_to_ptr.vmem [resolvable:$true] %s54
      %60 = dma.hbm_to_vmem [thread:$0]  %s4, 1024, %s55, [#allocation8], 64, 64, 4
    $region17: #{tpu_custom_call.1} parent=1 // pred_fallthru
      _
    // Predicated region
    $region18: #{tpu_custom_call.1} parent=1 // pred_check
      _
    $region19: #{tpu_custom_call.1} parent=1 // pred_check_branch
      %62 = sbr.rel (0) target = $region21
    $region20: #{tpu_custom_call.1} parent=1 // pred_region
      _
    $region21: #{tpu_custom_call.1} parent=1 // pred_fallthru
      _
    // Predicated region
    $region22: #{tpu_custom_call.1} parent=1 // pred_check
      _
    $region23: #{tpu_custom_call.1} parent=1 // pred_check_branch
      %64 = sbr.rel (0) target = $region25
    $region24: #{tpu_custom_call.1} parent=1 // pred_region
      %s66 = ssub.s32 1024, 1024
      %67 = vsyncadd [#allocation11], %s66
      %s68 = sshll.u32 [#allocation10], 4
      %s69 = int_to_ptr.vmem [resolvable:$true] %s68
      %74 = dma.hbm_to_vmem [thread:$0]  %s6, 1024, %s69, [#allocation11], 64, 64, 4
    $region25: #{tpu_custom_call.1} parent=1 // pred_fallthru
      _
    // Predicated region
    $region26: #{tpu_custom_call.1} parent=1 // pred_check
      _
    $region27: #{tpu_custom_call.1} parent=1 // pred_check_branch
      %76 = sbr.rel (0) target = $region29
    $region28: #{tpu_custom_call.1} parent=1 // pred_region
      _
    $region29: #{tpu_custom_call.1} parent=1 // pred_fallthru
      _
    // Predicated region
    $region30: #{tpu_custom_call.1} parent=1 // pred_check
      _
    $region31: #{tpu_custom_call.1} parent=1 // pred_check_branch
      %78 = sbr.rel (0) target = $region33
    $region32: #{tpu_custom_call.1} parent=1 // pred_region
      %s80 = ssub.s32 1024, 1024
      %81 = vsyncadd [#allocation11], %s80
      %s82 = sshll.u32 [#allocation12], 4
      %s83 = int_to_ptr.vmem [resolvable:$true] %s82
      %88 = dma.hbm_to_vmem [thread:$0]  %s8, 1024, %s83, [#allocation11], 64, 64, 4
    $region33: #{tpu_custom_call.1} parent=1 // pred_fallthru
      _
    // Predicated region
    $region34: #{tpu_custom_call.1} parent=1 // pred_check
      _
    $region35: #{tpu_custom_call.1} parent=1 // pred_check_branch
      %90 = sbr.rel (0) target = $region37
    $region36: #{tpu_custom_call.1} parent=1 // pred_region
      _
    $region37: #{tpu_custom_call.1} parent=1 // pred_fallthru
      _
    // Predicated region
    $region38: #{tpu_custom_call.1} parent=1 // pred_check
      _
    $region39: #{tpu_custom_call.1} parent=1 // pred_check_branch
      %92 = sbr.rel (0) target = $region41
    $region40: #{tpu_custom_call.1} parent=1 // pred_region
      %s94 = ssub.s32 1024, 1024
      %95 = vsyncadd [#allocation14], %s94
      %s96 = sshll.u32 [#allocation13], 4
      %s97 = int_to_ptr.vmem [resolvable:$true] %s96
      %102 = dma.hbm_to_vmem [thread:$0]  %s10, 1024, %s97, [#allocation14], 64, 64, 4
    $region41: #{tpu_custom_call.1} parent=1 // pred_fallthru
      _
    // Predicated region
    $region42: #{tpu_custom_call.1} parent=1 // pred_check
      _
    $region43: #{tpu_custom_call.1} parent=1 // pred_check_branch
      %104 = sbr.rel (0) target = $region45
    $region44: #{tpu_custom_call.1} parent=1 // pred_region
      _
    $region45: #{tpu_custom_call.1} parent=1 // pred_fallthru
      _
    // Predicated region
    $region46: #{tpu_custom_call.1} parent=1 // pred_check
      _
    $region47: #{tpu_custom_call.1} parent=1 // pred_check_branch
      %106 = sbr.rel (0) target = $region49
    $region48: #{tpu_custom_call.1} parent=1 // pred_region
      %107 = dma.done [#allocation5], 1024
    $region49: #{tpu_custom_call.1} parent=1 // pred_fallthru
      _
    // Predicated region
    $region50: #{tpu_custom_call.1} parent=1 // pred_check
      _
    $region51: #{tpu_custom_call.1} parent=1 // pred_check_branch
      %109 = sbr.rel (0) target = $region53
    $region52: #{tpu_custom_call.1} parent=1 // pred_region
      %110 = dma.done [#allocation8], 8192
    $region53: #{tpu_custom_call.1} parent=1 // pred_fallthru
      _
    // Predicated region
    $region54: #{tpu_custom_call.1} parent=1 // pred_check
      _
    $region55: #{tpu_custom_call.1} parent=1 // pred_check_branch
      %112 = sbr.rel (0) target = $region57
    $region56: #{tpu_custom_call.1} parent=1 // pred_region
      %113 = dma.done [#allocation8], 1024
    $region57: #{tpu_custom_call.1} parent=1 // pred_fallthru
      _
    // Predicated region
    $region58: #{tpu_custom_call.1} parent=1 // pred_check
      _
    $region59: #{tpu_custom_call.1} parent=1 // pred_check_branch
      %115 = sbr.rel (0) target = $region61
    $region60: #{tpu_custom_call.1} parent=1 // pred_region
      %116 = dma.done [#allocation11], 1024
    $region61: #{tpu_custom_call.1} parent=1 // pred_fallthru
      _
    // Predicated region
    $region62: #{tpu_custom_call.1} parent=1 // pred_check
      _
    $region63: #{tpu_custom_call.1} parent=1 // pred_check_branch
      %118 = sbr.rel (0) target = $region65
    $region64: #{tpu_custom_call.1} parent=1 // pred_region
      %119 = dma.done [#allocation11], 1024
    $region65: #{tpu_custom_call.1} parent=1 // pred_fallthru
      _
    // Predicated region
    $region66: #{tpu_custom_call.1} parent=1 // pred_check
      _
    $region67: #{tpu_custom_call.1} parent=1 // pred_check_branch
      %121 = sbr.rel (0) target = $region69
    $region68: #{tpu_custom_call.1} parent=1 // pred_region
      %122 = dma.done [#allocation14], 1024
    $region69: #{tpu_custom_call.1} parent=1 // pred_fallthru
      _
    %s124 = sld [smem:[#allocation3]]
    %v125 = vld [vmem:[#allocation4] sm:$0xff]
    %v126 = vld [vmem:[#allocation4 + $0x8] sm:$0xff]
    %v127 = vld [vmem:[#allocation4 + $0x10] sm:$0xff]
    %v128 = vld [vmem:[#allocation4 + $0x18] sm:$0xff]
    %v129 = vld [vmem:[#allocation4 + $0x20] sm:$0xff]
    %v130 = vld [vmem:[#allocation4 + $0x28] sm:$0xff]
    %v131 = vld [vmem:[#allocation4 + $0x30] sm:$0xff]
    %v132 = vld [vmem:[#allocation4 + $0x38] sm:$0xff]
    %v133 = vld [vmem:[#allocation7] sm:$0xf]
    %v134 = vld [vmem:[#allocation7 + $0x4] sm:$0xf]
    %v135 = vld [vmem:[#allocation7 + $0x8] sm:$0xf]
    %v136 = vld [vmem:[#allocation7 + $0xc] sm:$0xf]
    %v137 = vld [vmem:[#allocation7 + $0x10] sm:$0xf]
    %v138 = vld [vmem:[#allocation7 + $0x14] sm:$0xf]
    %v139 = vld [vmem:[#allocation7 + $0x18] sm:$0xf]
    %v140 = vld [vmem:[#allocation7 + $0x1c] sm:$0xf]
    %v141 = vld [vmem:[#allocation7 + $0x20] sm:$0xf]
    %v142 = vld [vmem:[#allocation7 + $0x24] sm:$0xf]
    %v143 = vld [vmem:[#allocation7 + $0x28] sm:$0xf]
    %v144 = vld [vmem:[#allocation7 + $0x2c] sm:$0xf]
    %v145 = vld [vmem:[#allocation7 + $0x30] sm:$0xf]
    %v146 = vld [vmem:[#allocation7 + $0x34] sm:$0xf]
    %v147 = vld [vmem:[#allocation7 + $0x38] sm:$0xf]
    %v148 = vld [vmem:[#allocation7 + $0x3c] sm:$0xf]
    %v149 = vld [vmem:[#allocation7 + $0x40] sm:$0xf]
    %v150 = vld [vmem:[#allocation7 + $0x44] sm:$0xf]
    %v151 = vld [vmem:[#allocation7 + $0x48] sm:$0xf]
    %v152 = vld [vmem:[#allocation7 + $0x4c] sm:$0xf]
    %v153 = vld [vmem:[#allocation7 + $0x50] sm:$0xf]
    %v154 = vld [vmem:[#allocation7 + $0x54] sm:$0xf]
    %v155 = vld [vmem:[#allocation7 + $0x58] sm:$0xf]
    %v156 = vld [vmem:[#allocation7 + $0x5c] sm:$0xf]
    %v157 = vld [vmem:[#allocation7 + $0x60] sm:$0xf]
    %v158 = vld [vmem:[#allocation7 + $0x64] sm:$0xf]
    %v159 = vld [vmem:[#allocation7 + $0x68] sm:$0xf]
    %v160 = vld [vmem:[#allocation7 + $0x6c] sm:$0xf]
    %v161 = vld [vmem:[#allocation7 + $0x70] sm:$0xf]
    %v162 = vld [vmem:[#allocation7 + $0x74] sm:$0xf]
    %v163 = vld [vmem:[#allocation7 + $0x78] sm:$0xf]
    %v164 = vld [vmem:[#allocation7 + $0x7c] sm:$0xf]
    %v165 = vld [vmem:[#allocation7 + $0x80] sm:$0xf]
    %v166 = vld [vmem:[#allocation7 + $0x84] sm:$0xf]
    %v167 = vld [vmem:[#allocation7 + $0x88] sm:$0xf]
    %v168 = vld [vmem:[#allocation7 + $0x8c] sm:$0xf]
    %v169 = vld [vmem:[#allocation7 + $0x90] sm:$0xf]
    %v170 = vld [vmem:[#allocation7 + $0x94] sm:$0xf]
    %v171 = vld [vmem:[#allocation7 + $0x98] sm:$0xf]
    %v172 = vld [vmem:[#allocation7 + $0x9c] sm:$0xf]
    %v173 = vld [vmem:[#allocation7 + $0xa0] sm:$0xf]
    %v174 = vld [vmem:[#allocation7 + $0xa4] sm:$0xf]
    %v175 = vld [vmem:[#allocation7 + $0xa8] sm:$0xf]
    %v176 = vld [vmem:[#allocation7 + $0xac] sm:$0xf]
    %v177 = vld [vmem:[#allocation7 + $0xb0] sm:$0xf]
    %v178 = vld [vmem:[#allocation7 + $0xb4] sm:$0xf]
    %v179 = vld [vmem:[#allocation7 + $0xb8] sm:$0xf]
    %v180 = vld [vmem:[#allocation7 + $0xbc] sm:$0xf]
    %v181 = vld [vmem:[#allocation7 + $0xc0] sm:$0xf]
    %v182 = vld [vmem:[#allocation7 + $0xc4] sm:$0xf]
    %v183 = vld [vmem:[#allocation7 + $0xc8] sm:$0xf]
    %v184 = vld [vmem:[#allocation7 + $0xcc] sm:$0xf]
    %v185 = vld [vmem:[#allocation7 + $0xd0] sm:$0xf]
    %v186 = vld [vmem:[#allocation7 + $0xd4] sm:$0xf]
    %v187 = vld [vmem:[#allocation7 + $0xd8] sm:$0xf]
    %v188 = vld [vmem:[#allocation7 + $0xdc] sm:$0xf]
    %v189 = vld [vmem:[#allocation7 + $0xe0] sm:$0xf]
    %v190 = vld [vmem:[#allocation7 + $0xe4] sm:$0xf]
    %v191 = vld [vmem:[#allocation7 + $0xe8] sm:$0xf]
    %v192 = vld [vmem:[#allocation7 + $0xec] sm:$0xf]
    %v193 = vld [vmem:[#allocation7 + $0xf0] sm:$0xf]
    %v194 = vld [vmem:[#allocation7 + $0xf4] sm:$0xf]
    %v195 = vld [vmem:[#allocation7 + $0xf8] sm:$0xf]
    %v196 = vld [vmem:[#allocation7 + $0xfc] sm:$0xf]
    %v197 = vld [vmem:[#allocation7 + $0x100] sm:$0xf]
    %v198 = vld [vmem:[#allocation7 + $0x104] sm:$0xf]
    %v199 = vld [vmem:[#allocation7 + $0x108] sm:$0xf]
    %v200 = vld [vmem:[#allocation7 + $0x10c] sm:$0xf]
    %v201 = vld [vmem:[#allocation7 + $0x110] sm:$0xf]
    %v202 = vld [vmem:[#allocation7 + $0x114] sm:$0xf]
    %v203 = vld [vmem:[#allocation7 + $0x118] sm:$0xf]
    %v204 = vld [vmem:[#allocation7 + $0x11c] sm:$0xf]
    %v205 = vld [vmem:[#allocation7 + $0x120] sm:$0xf]
    %v206 = vld [vmem:[#allocation7 + $0x124] sm:$0xf]
    %v207 = vld [vmem:[#allocation7 + $0x128] sm:$0xf]
    %v208 = vld [vmem:[#allocation7 + $0x12c] sm:$0xf]
    %v209 = vld [vmem:[#allocation7 + $0x130] sm:$0xf]
    %v210 = vld [vmem:[#allocation7 + $0x134] sm:$0xf]
    %v211 = vld [vmem:[#allocation7 + $0x138] sm:$0xf]
    %v212 = vld [vmem:[#allocation7 + $0x13c] sm:$0xf]
    %v213 = vld [vmem:[#allocation7 + $0x140] sm:$0xf]
    %v214 = vld [vmem:[#allocation7 + $0x144] sm:$0xf]
    %v215 = vld [vmem:[#allocation7 + $0x148] sm:$0xf]
    %v216 = vld [vmem:[#allocation7 + $0x14c] sm:$0xf]
    %v217 = vld [vmem:[#allocation7 + $0x150] sm:$0xf]
    %v218 = vld [vmem:[#allocation7 + $0x154] sm:$0xf]
    %v219 = vld [vmem:[#allocation7 + $0x158] sm:$0xf]
    %v220 = vld [vmem:[#allocation7 + $0x15c] sm:$0xf]
    %v221 = vld [vmem:[#allocation7 + $0x160] sm:$0xf]
    %v222 = vld [vmem:[#allocation7 + $0x164] sm:$0xf]
    %v223 = vld [vmem:[#allocation7 + $0x168] sm:$0xf]
    %v224 = vld [vmem:[#allocation7 + $0x16c] sm:$0xf]
    %v225 = vld [vmem:[#allocation7 + $0x170] sm:$0xf]
    %v226 = vld [vmem:[#allocation7 + $0x174] sm:$0xf]
    %v227 = vld [vmem:[#allocation7 + $0x178] sm:$0xf]
    %v228 = vld [vmem:[#allocation7 + $0x17c] sm:$0xf]
    %v229 = vld [vmem:[#allocation7 + $0x180] sm:$0xf]
    %v230 = vld [vmem:[#allocation7 + $0x184] sm:$0xf]
    %v231 = vld [vmem:[#allocation7 + $0x188] sm:$0xf]
    %v232 = vld [vmem:[#allocation7 + $0x18c] sm:$0xf]
    %v233 = vld [vmem:[#allocation7 + $0x190] sm:$0xf]
    %v234 = vld [vmem:[#allocation7 + $0x194] sm:$0xf]
    %v235 = vld [vmem:[#allocation7 + $0x198] sm:$0xf]
    %v236 = vld [vmem:[#allocation7 + $0x19c] sm:$0xf]
    %v237 = vld [vmem:[#allocation7 + $0x1a0] sm:$0xf]
    %v238 = vld [vmem:[#allocation7 + $0x1a4] sm:$0xf]
    %v239 = vld [vmem:[#allocation7 + $0x1a8] sm:$0xf]
    %v240 = vld [vmem:[#allocation7 + $0x1ac] sm:$0xf]
    %v241 = vld [vmem:[#allocation7 + $0x1b0] sm:$0xf]
    %v242 = vld [vmem:[#allocation7 + $0x1b4] sm:$0xf]
    %v243 = vld [vmem:[#allocation7 + $0x1b8] sm:$0xf]
    %v244 = vld [vmem:[#allocation7 + $0x1bc] sm:$0xf]
    %v245 = vld [vmem:[#allocation7 + $0x1c0] sm:$0xf]
    %v246 = vld [vmem:[#allocation7 + $0x1c4] sm:$0xf]
    %v247 = vld [vmem:[#allocation7 + $0x1c8] sm:$0xf]
    %v248 = vld [vmem:[#allocation7 + $0x1cc] sm:$0xf]
    %v249 = vld [vmem:[#allocation7 + $0x1d0] sm:$0xf]
    %v250 = vld [vmem:[#allocation7 + $0x1d4] sm:$0xf]
    %v251 = vld [vmem:[#allocation7 + $0x1d8] sm:$0xf]
    %v252 = vld [vmem:[#allocation7 + $0x1dc] sm:$0xf]
    %v253 = vld [vmem:[#allocation7 + $0x1e0] sm:$0xf]
    %v254 = vld [vmem:[#allocation7 + $0x1e4] sm:$0xf]
    %v255 = vld [vmem:[#allocation7 + $0x1e8] sm:$0xf]
    %v256 = vld [vmem:[#allocation7 + $0x1ec] sm:$0xf]
    %v257 = vld [vmem:[#allocation7 + $0x1f0] sm:$0xf]
    %v258 = vld [vmem:[#allocation7 + $0x1f4] sm:$0xf]
    %v259 = vld [vmem:[#allocation7 + $0x1f8] sm:$0xf]
    %v260 = vld [vmem:[#allocation7 + $0x1fc] sm:$0xf]
    %v261 = vld [vmem:[%s3] sm:$0x1]
    %v263 = vlaneseq
    %v264 = vshrl.u32 %v263, 7
    %v265 = vsub.s32 0, %v264
    %v266 = vrot.slane %v261, %v265
    %v276 = vunpack.c.l.b16 %v125
    %v277 = vunpack.c.h.b16 %v125
    %v278 = vunpack.c.l.b16 %v126
    %v279 = vunpack.c.h.b16 %v126
    %v280 = vunpack.c.l.b16 %v127
    %v281 = vunpack.c.h.b16 %v127
    %v282 = vunpack.c.l.b16 %v128
    %v283 = vunpack.c.h.b16 %v128
    %v284 = vunpack.c.l.b16 %v129
    %v285 = vunpack.c.h.b16 %v129
    %v286 = vunpack.c.l.b16 %v130
    %v287 = vunpack.c.h.b16 %v130
    %v288 = vunpack.c.l.b16 %v131
    %v289 = vunpack.c.h.b16 %v131
    %v290 = vunpack.c.l.b16 %v132
    %v291 = vunpack.c.h.b16 %v132
    %v292 = vpack.c.b16 %v284, %v276
    %v293 = vpack.c.b16 %v285, %v277
    %v294 = vpack.c.b16 %v286, %v278
    %v295 = vpack.c.b16 %v287, %v279
    %v296 = vpack.c.b16 %v288, %v280
    %v297 = vpack.c.b16 %v289, %v281
    %v298 = vpack.c.b16 %v290, %v282
    %v299 = vpack.c.b16 %v291, %v283
    %v436 = vunpack.c.l.b16 %v133
    %v437 = vunpack.c.l.b16 %v134
    %v438 = vunpack.c.l.b16 %v135
    %v439 = vunpack.c.l.b16 %v136
    %v440 = vunpack.c.l.b16 %v137
    %v441 = vunpack.c.l.b16 %v138
    %v442 = vunpack.c.l.b16 %v139
    %v443 = vunpack.c.l.b16 %v140
    %v444 = vunpack.c.l.b16 %v141
    %v445 = vunpack.c.l.b16 %v142
    %v446 = vunpack.c.l.b16 %v143
    %v447 = vunpack.c.l.b16 %v144
    %v448 = vunpack.c.l.b16 %v145
    %v449 = vunpack.c.l.b16 %v146
    %v450 = vunpack.c.l.b16 %v147
    %v451 = vunpack.c.l.b16 %v148
    %v452 = vunpack.c.l.b16 %v149
    %v453 = vunpack.c.l.b16 %v150
    %v454 = vunpack.c.l.b16 %v151
    %v455 = vunpack.c.l.b16 %v152
    %v456 = vunpack.c.l.b16 %v153
    %v457 = vunpack.c.l.b16 %v154
    %v458 = vunpack.c.l.b16 %v155
    %v459 = vunpack.c.l.b16 %v156
    %v460 = vunpack.c.l.b16 %v157
    %v461 = vunpack.c.l.b16 %v158
    %v462 = vunpack.c.l.b16 %v159
    %v463 = vunpack.c.l.b16 %v160
    %v464 = vunpack.c.l.b16 %v161
    %v465 = vunpack.c.l.b16 %v162
    %v466 = vunpack.c.l.b16 %v163
    %v467 = vunpack.c.l.b16 %v164
    %v468 = vunpack.c.l.b16 %v165
    %v469 = vunpack.c.l.b16 %v166
    %v470 = vunpack.c.l.b16 %v167
    %v471 = vunpack.c.l.b16 %v168
    %v472 = vunpack.c.l.b16 %v169
    %v473 = vunpack.c.l.b16 %v170
    %v474 = vunpack.c.l.b16 %v171
    %v475 = vunpack.c.l.b16 %v172
    %v476 = vunpack.c.l.b16 %v173
    %v477 = vunpack.c.l.b16 %v174
    %v478 = vunpack.c.l.b16 %v175
    %v479 = vunpack.c.l.b16 %v176
    %v480 = vunpack.c.l.b16 %v177
    %v481 = vunpack.c.l.b16 %v178
    %v482 = vunpack.c.l.b16 %v179
    %v483 = vunpack.c.l.b16 %v180
    %v484 = vunpack.c.l.b16 %v181
    %v485 = vunpack.c.l.b16 %v182
    %v486 = vunpack.c.l.b16 %v183
    %v487 = vunpack.c.l.b16 %v184
    %v488 = vunpack.c.l.b16 %v185
    %v489 = vunpack.c.l.b16 %v186
    %v490 = vunpack.c.l.b16 %v187
    %v491 = vunpack.c.l.b16 %v188
    %v492 = vunpack.c.l.b16 %v189
    %v493 = vunpack.c.l.b16 %v190
    %v494 = vunpack.c.l.b16 %v191
    %v495 = vunpack.c.l.b16 %v192
    %v496 = vunpack.c.l.b16 %v193
    %v497 = vunpack.c.l.b16 %v194
    %v498 = vunpack.c.l.b16 %v195
    %v499 = vunpack.c.l.b16 %v196
    %v500 = vunpack.c.l.b16 %v197
    %v501 = vunpack.c.l.b16 %v198
    %v502 = vunpack.c.l.b16 %v199
    %v503 = vunpack.c.l.b16 %v200
    %v504 = vunpack.c.l.b16 %v201
    %v505 = vunpack.c.l.b16 %v202
    %v506 = vunpack.c.l.b16 %v203
    %v507 = vunpack.c.l.b16 %v204
    %v508 = vunpack.c.l.b16 %v205
    %v509 = vunpack.c.l.b16 %v206
    %v510 = vunpack.c.l.b16 %v207
    %v511 = vunpack.c.l.b16 %v208
    %v512 = vunpack.c.l.b16 %v209
    %v513 = vunpack.c.l.b16 %v210
    %v514 = vunpack.c.l.b16 %v211
    %v515 = vunpack.c.l.b16 %v212
    %v516 = vunpack.c.l.b16 %v213
    %v517 = vunpack.c.l.b16 %v214
    %v518 = vunpack.c.l.b16 %v215
    %v519 = vunpack.c.l.b16 %v216
    %v520 = vunpack.c.l.b16 %v217
    %v521 = vunpack.c.l.b16 %v218
    %v522 = vunpack.c.l.b16 %v219
    %v523 = vunpack.c.l.b16 %v220
    %v524 = vunpack.c.l.b16 %v221
    %v525 = vunpack.c.l.b16 %v222
    %v526 = vunpack.c.l.b16 %v223
    %v527 = vunpack.c.l.b16 %v224
    %v528 = vunpack.c.l.b16 %v225
    %v529 = vunpack.c.l.b16 %v226
    %v530 = vunpack.c.l.b16 %v227
    %v531 = vunpack.c.l.b16 %v228
    %v532 = vunpack.c.l.b16 %v229
    %v533 = vunpack.c.l.b16 %v230
    %v534 = vunpack.c.l.b16 %v231
    %v535 = vunpack.c.l.b16 %v232
    %v536 = vunpack.c.l.b16 %v233
    %v537 = vunpack.c.l.b16 %v234
    %v538 = vunpack.c.l.b16 %v235
    %v539 = vunpack.c.l.b16 %v236
    %v540 = vunpack.c.l.b16 %v237
    %v541 = vunpack.c.l.b16 %v238
    %v542 = vunpack.c.l.b16 %v239
    %v543 = vunpack.c.l.b16 %v240
    %v544 = vunpack.c.l.b16 %v241
    %v545 = vunpack.c.l.b16 %v242
    %v546 = vunpack.c.l.b16 %v243
    %v547 = vunpack.c.l.b16 %v244
    %v548 = vunpack.c.l.b16 %v245
    %v549 = vunpack.c.l.b16 %v246
    %v550 = vunpack.c.l.b16 %v247
    %v551 = vunpack.c.l.b16 %v248
    %v552 = vunpack.c.l.b16 %v249
    %v553 = vunpack.c.l.b16 %v250
    %v554 = vunpack.c.l.b16 %v251
    %v555 = vunpack.c.l.b16 %v252
    %v556 = vunpack.c.l.b16 %v253
    %v557 = vunpack.c.l.b16 %v254
    %v558 = vunpack.c.l.b16 %v255
    %v559 = vunpack.c.l.b16 %v256
    %v560 = vunpack.c.l.b16 %v257
    %v561 = vunpack.c.l.b16 %v258
    %v562 = vunpack.c.l.b16 %v259
    %v563 = vunpack.c.l.b16 %v260
    %v564 = vpack.c.b16 %v437, %v436
    %v565 = vpack.c.b16 %v439, %v438
    %v566 = vpack.c.b16 %v441, %v440
    %v567 = vpack.c.b16 %v443, %v442
    %v568 = vpack.c.b16 %v445, %v444
    %v569 = vpack.c.b16 %v447, %v446
    %v570 = vpack.c.b16 %v449, %v448
    %v571 = vpack.c.b16 %v451, %v450
    %v572 = vpack.c.b16 %v453, %v452
    %v573 = vpack.c.b16 %v455, %v454
    %v574 = vpack.c.b16 %v457, %v456
    %v575 = vpack.c.b16 %v459, %v458
    %v576 = vpack.c.b16 %v461, %v460
    %v577 = vpack.c.b16 %v463, %v462
    %v578 = vpack.c.b16 %v465, %v464
    %v579 = vpack.c.b16 %v467, %v466
    %v580 = vpack.c.b16 %v469, %v468
    %v581 = vpack.c.b16 %v471, %v470
    %v582 = vpack.c.b16 %v473, %v472
    %v583 = vpack.c.b16 %v475, %v474
    %v584 = vpack.c.b16 %v477, %v476
    %v585 = vpack.c.b16 %v479, %v478
    %v586 = vpack.c.b16 %v481, %v480
    %v587 = vpack.c.b16 %v483, %v482
    %v588 = vpack.c.b16 %v485, %v484
    %v589 = vpack.c.b16 %v487, %v486
    %v590 = vpack.c.b16 %v489, %v488
    %v591 = vpack.c.b16 %v491, %v490
    %v592 = vpack.c.b16 %v493, %v492
    %v593 = vpack.c.b16 %v495, %v494
    %v594 = vpack.c.b16 %v497, %v496
    %v595 = vpack.c.b16 %v499, %v498
    %v596 = vpack.c.b16 %v501, %v500
    %v597 = vpack.c.b16 %v503, %v502
    %v598 = vpack.c.b16 %v505, %v504
    %v599 = vpack.c.b16 %v507, %v506
    %v600 = vpack.c.b16 %v509, %v508
    %v601 = vpack.c.b16 %v511, %v510
    %v602 = vpack.c.b16 %v513, %v512
    %v603 = vpack.c.b16 %v515, %v514
    %v604 = vpack.c.b16 %v517, %v516
    %v605 = vpack.c.b16 %v519, %v518
    %v606 = vpack.c.b16 %v521, %v520
    %v607 = vpack.c.b16 %v523, %v522
    %v608 = vpack.c.b16 %v525, %v524
    %v609 = vpack.c.b16 %v527, %v526
    %v610 = vpack.c.b16 %v529, %v528
    %v611 = vpack.c.b16 %v531, %v530
    %v612 = vpack.c.b16 %v533, %v532
    %v613 = vpack.c.b16 %v535, %v534
    %v614 = vpack.c.b16 %v537, %v536
    %v615 = vpack.c.b16 %v539, %v538
    %v616 = vpack.c.b16 %v541, %v540
    %v617 = vpack.c.b16 %v543, %v542
    %v618 = vpack.c.b16 %v545, %v544
    %v619 = vpack.c.b16 %v547, %v546
    %v620 = vpack.c.b16 %v549, %v548
    %v621 = vpack.c.b16 %v551, %v550
    %v622 = vpack.c.b16 %v553, %v552
    %v623 = vpack.c.b16 %v555, %v554
    %v624 = vpack.c.b16 %v557, %v556
    %v625 = vpack.c.b16 %v559, %v558
    %v626 = vpack.c.b16 %v561, %v560
    %v627 = vpack.c.b16 %v563, %v562
    %692 = vmatprep.subr.bf16.mxu0 0
    %693 = vmatpush1.bf16.msra.mxu0 %v564
    %694 = vmatprep.subr.bf16.mxu0 0
    %695 = vmatpush1.bf16.msra.mxu0 %v565
    %696 = vmatprep.subr.bf16.mxu0 0
    %697 = vmatpush1.bf16.msra.mxu0 %v566
    %698 = vmatprep.subr.bf16.mxu0 0
    %699 = vmatpush1.bf16.msra.mxu0 %v567
    %700 = vmatprep.subr.bf16.mxu0 0
    %701 = vmatpush1.bf16.msra.mxu0 %v568
    %702 = vmatprep.subr.bf16.mxu0 0
    %703 = vmatpush1.bf16.msra.mxu0 %v569
    %704 = vmatprep.subr.bf16.mxu0 0
    %705 = vmatpush1.bf16.msra.mxu0 %v570
    %706 = vmatprep.subr.bf16.mxu0 0
    %707 = vmatpush1.bf16.msra.mxu0 %v571
    %708 = vmatprep.subr.bf16.mxu0 0
    %709 = vmatpush1.bf16.msra.mxu0 %v572
    %710 = vmatprep.subr.bf16.mxu0 0
    %711 = vmatpush1.bf16.msra.mxu0 %v573
    %712 = vmatprep.subr.bf16.mxu0 0
    %713 = vmatpush1.bf16.msra.mxu0 %v574
    %714 = vmatprep.subr.bf16.mxu0 0
    %715 = vmatpush1.bf16.msra.mxu0 %v575
    %716 = vmatprep.subr.bf16.mxu0 0
    %717 = vmatpush1.bf16.msra.mxu0 %v576
    %718 = vmatprep.subr.bf16.mxu0 0
    %719 = vmatpush1.bf16.msra.mxu0 %v577
    %720 = vmatprep.subr.bf16.mxu0 0
    %721 = vmatpush1.bf16.msra.mxu0 %v578
    %722 = vmatprep.subr.bf16.mxu0 0
    %723 = vmatpush1.bf16.msra.mxu0 %v579
    %724 = vmatprep.mubr.bf16.mxu0 %v293
    %725 = vmatmul.mubr.bf16.gmra.mrb[0].mxu0 %v292
    %v726 = vpop.f32.mrb[0].mxu0
    %v727 = vadd.f32 %v266, %v726
    %v728 = vpop.f32.mrb[0].mxu0
    %v729 = vpop.f32.mrb[0].mxu0
    %v730 = vadd.f32 %v266, %v729
    %v731 = vpop.f32.mrb[0].mxu0
    %732 = vdwg.mxu0
    %733 = vmatprep.subr.bf16.mxu0 0
    %734 = vmatpush1.bf16.msra.mxu0 %v580
    %735 = vmatprep.subr.bf16.mxu0 0
    %736 = vmatpush1.bf16.msra.mxu0 %v581
    %737 = vmatprep.subr.bf16.mxu0 0
    %738 = vmatpush1.bf16.msra.mxu0 %v582
    %739 = vmatprep.subr.bf16.mxu0 0
    %740 = vmatpush1.bf16.msra.mxu0 %v583
    %741 = vmatprep.subr.bf16.mxu0 0
    %742 = vmatpush1.bf16.msra.mxu0 %v584
    %743 = vmatprep.subr.bf16.mxu0 0
    %744 = vmatpush1.bf16.msra.mxu0 %v585
    %745 = vmatprep.subr.bf16.mxu0 0
    %746 = vmatpush1.bf16.msra.mxu0 %v586
    %747 = vmatprep.subr.bf16.mxu0 0
    %748 = vmatpush1.bf16.msra.mxu0 %v587
    %749 = vmatprep.subr.bf16.mxu0 0
    %750 = vmatpush1.bf16.msra.mxu0 %v588
    %751 = vmatprep.subr.bf16.mxu0 0
    %752 = vmatpush1.bf16.msra.mxu0 %v589
    %753 = vmatprep.subr.bf16.mxu0 0
    %754 = vmatpush1.bf16.msra.mxu0 %v590
    %755 = vmatprep.subr.bf16.mxu0 0
    %756 = vmatpush1.bf16.msra.mxu0 %v591
    %757 = vmatprep.subr.bf16.mxu0 0
    %758 = vmatpush1.bf16.msra.mxu0 %v592
    %759 = vmatprep.subr.bf16.mxu0 0
    %760 = vmatpush1.bf16.msra.mxu0 %v593
    %761 = vmatprep.subr.bf16.mxu0 0
    %762 = vmatpush1.bf16.msra.mxu0 %v594
    %763 = vmatprep.subr.bf16.mxu0 0
    %764 = vmatpush1.bf16.msra.mxu0 %v595
    %765 = vmatprep.mubr.bf16.mxu0 %v295
    %766 = vmatmul.mubr.bf16.gmra.mrb[0].mxu0 %v294
    %v767 = vpop.f32.mrb[0].mxu0
    %v768 = vadd.f32 %v727, %v767
    %v769 = vpop.f32.mrb[0].mxu0
    %v770 = vpop.f32.mrb[0].mxu0
    %v771 = vadd.f32 %v730, %v770
    %v772 = vpop.f32.mrb[0].mxu0
    %773 = vdwg.mxu0
    %774 = vmatprep.subr.bf16.mxu0 0
    %775 = vmatpush1.bf16.msra.mxu0 %v596
    %776 = vmatprep.subr.bf16.mxu0 0
    %777 = vmatpush1.bf16.msra.mxu0 %v597
    %778 = vmatprep.subr.bf16.mxu0 0
    %779 = vmatpush1.bf16.msra.mxu0 %v598
    %780 = vmatprep.subr.bf16.mxu0 0
    %781 = vmatpush1.bf16.msra.mxu0 %v599
    %782 = vmatprep.subr.bf16.mxu0 0
    %783 = vmatpush1.bf16.msra.mxu0 %v600
    %784 = vmatprep.subr.bf16.mxu0 0
    %785 = vmatpush1.bf16.msra.mxu0 %v601
    %786 = vmatprep.subr.bf16.mxu0 0
    %787 = vmatpush1.bf16.msra.mxu0 %v602
    %788 = vmatprep.subr.bf16.mxu0 0
    %789 = vmatpush1.bf16.msra.mxu0 %v603
    %790 = vmatprep.subr.bf16.mxu0 0
    %791 = vmatpush1.bf16.msra.mxu0 %v604
    %792 = vmatprep.subr.bf16.mxu0 0
    %793 = vmatpush1.bf16.msra.mxu0 %v605
    %794 = vmatprep.subr.bf16.mxu0 0
    %795 = vmatpush1.bf16.msra.mxu0 %v606
    %796 = vmatprep.subr.bf16.mxu0 0
    %797 = vmatpush1.bf16.msra.mxu0 %v607
    %798 = vmatprep.subr.bf16.mxu0 0
    %799 = vmatpush1.bf16.msra.mxu0 %v608
    %800 = vmatprep.subr.bf16.mxu0 0
    %801 = vmatpush1.bf16.msra.mxu0 %v609
    %802 = vmatprep.subr.bf16.mxu0 0
    %803 = vmatpush1.bf16.msra.mxu0 %v610
    %804 = vmatprep.subr.bf16.mxu0 0
    %805 = vmatpush1.bf16.msra.mxu0 %v611
    %806 = vmatprep.mubr.bf16.mxu0 %v297
    %807 = vmatmul.mubr.bf16.gmra.mrb[0].mxu0 %v296
    %v808 = vpop.f32.mrb[0].mxu0
    %v809 = vadd.f32 %v768, %v808
    %v810 = vpop.f32.mrb[0].mxu0
    %v811 = vpop.f32.mrb[0].mxu0
    %v812 = vadd.f32 %v771, %v811
    %v813 = vpop.f32.mrb[0].mxu0
    %814 = vdwg.mxu0
    %815 = vmatprep.subr.bf16.mxu0 0
    %816 = vmatpush1.bf16.msra.mxu0 %v612
    %817 = vmatprep.subr.bf16.mxu0 0
    %818 = vmatpush1.bf16.msra.mxu0 %v613
    %819 = vmatprep.subr.bf16.mxu0 0
    %820 = vmatpush1.bf16.msra.mxu0 %v614
    %821 = vmatprep.subr.bf16.mxu0 0
    %822 = vmatpush1.bf16.msra.mxu0 %v615
    %823 = vmatprep.subr.bf16.mxu0 0
    %824 = vmatpush1.bf16.msra.mxu0 %v616
    %825 = vmatprep.subr.bf16.mxu0 0
    %826 = vmatpush1.bf16.msra.mxu0 %v617
    %827 = vmatprep.subr.bf16.mxu0 0
    %828 = vmatpush1.bf16.msra.mxu0 %v618
    %829 = vmatprep.subr.bf16.mxu0 0
    %830 = vmatpush1.bf16.msra.mxu0 %v619
    %831 = vmatprep.subr.bf16.mxu0 0
    %832 = vmatpush1.bf16.msra.mxu0 %v620
    %833 = vmatprep.subr.bf16.mxu0 0
    %834 = vmatpush1.bf16.msra.mxu0 %v621
    %835 = vmatprep.subr.bf16.mxu0 0
    %836 = vmatpush1.bf16.msra.mxu0 %v622
    %837 = vmatprep.subr.bf16.mxu0 0
    %838 = vmatpush1.bf16.msra.mxu0 %v623
    %839 = vmatprep.subr.bf16.mxu0 0
    %840 = vmatpush1.bf16.msra.mxu0 %v624
    %841 = vmatprep.subr.bf16.mxu0 0
    %842 = vmatpush1.bf16.msra.mxu0 %v625
    %843 = vmatprep.subr.bf16.mxu0 0
    %844 = vmatpush1.bf16.msra.mxu0 %v626
    %845 = vmatprep.subr.bf16.mxu0 0
    %846 = vmatpush1.bf16.msra.mxu0 %v627
    %847 = vmatprep.mubr.bf16.mxu0 %v299
    %848 = vmatmul.mubr.bf16.gmra.mrb[0].mxu0 %v298
    %v849 = vpop.f32.mrb[0].mxu0
    %v850 = vadd.f32 %v809, %v849
    %v851 = vpop.f32.mrb[0].mxu0
    %v852 = vpop.f32.mrb[0].mxu0
    %v853 = vadd.f32 %v812, %v852
    %v854 = vpop.f32.mrb[0].mxu0
    %855 = vdwg.mxu0
    %v856 = vlaneseq
    %v857 = vand.u32 %v856, 127
    %858 = vmax.xlane.f32.xlu0 %v850
    %v859 = vpop.xlane.xlu0 %858
    %860 = vmax.xlane.f32.xlu0 %v853
    %v861 = vpop.xlane.xlu0 %860
    %vm862 = vcmp.eq.f32.partialorder %v850, %v859
    %vm863 = vcmp.eq.f32.partialorder %v853, %v861
    %v864 = vsel %vm862, %v857, 128
    %v865 = vsel %vm863, %v857, 128
    %v866 = vand.u32 %v864, 65535
    %v867 = vshra.s32 %v864, 16
    %v868 = vcvt.s32.f32 %v866
    %v869 = vcvt.s32.f32 %v867
    %870 = vmin.xlane.f32.xlu0 %v869
    %v871 = vpop.xlane.xlu0 %870
    %vm872 = vcmp.eq.f32.partialorder %v869, %v871
    %v873 = vsel %vm872, %v868, inf
    %874 = vmin.xlane.f32.xlu0 %v873
    %v875 = vpop.xlane.xlu0 %874
    %v876 = vcvt.f32.s32 %v875
    %v877 = vcvt.f32.s32 %v871
    %v878 = vshll.u32 %v877, 16
    %v879 = vadd.s32 %v878, %v876
    %v880 = vand.u32 %v865, 65535
    %v881 = vshra.s32 %v865, 16
    %v882 = vcvt.s32.f32 %v880
    %v883 = vcvt.s32.f32 %v881
    %884 = vmin.xlane.f32.xlu0 %v883
    %v885 = vpop.xlane.xlu0 %884
    %vm886 = vcmp.eq.f32.partialorder %v883, %v885
    %v887 = vsel %vm886, %v882, inf
    %888 = vmin.xlane.f32.xlu0 %v887
    %v889 = vpop.xlane.xlu0 %888
    %v890 = vcvt.f32.s32 %v889
    %v891 = vcvt.f32.s32 %v885
    %v892 = vshll.u32 %v891, 16
    %v893 = vadd.s32 %v892, %v890
    %v894 = vsub.s32 %v857, %v879
    %v895 = vsub.s32 %v857, %v893
    %vm896 = vcmp.lt.s32.totalorder %v894, 0
    %v897 = vsub.s32 0, %v894
    %v898 = vsel %vm896, %v897, %v894
    %vm899 = vcmp.lt.s32.totalorder %v895, 0
    %v900 = vsub.s32 0, %v895
    %v901 = vsel %vm899, %v900, %v895
    %vm902 = vcmp.ge.s32.totalorder %v898, 1
    %vm903 = vcmp.ge.s32.totalorder %v901, 1
    %s904 = ssub.s32 %s124, 1
    %v905 = vstv %s904
    %vm906 = vcmp.le.s32.totalorder %v898, %v905
    %vm907 = vcmp.le.s32.totalorder %v901, %v905
    %vm908 = vmand %vm902, %vm906
    %vm909 = vmand %vm903, %vm907
    %vm910 = vcmp.gt.s32.totalorder %v857, 0
    %vm911 = vmand %vm908, %vm910
    %vm912 = vmand %vm909, %vm910
    %vm913 = vcmp.eq.s32.totalorder %v857, 0
    %vm914 = vcmp.gt.s32.totalorder %v879, 0
    %vm915 = vcmp.gt.s32.totalorder %v893, 0
    %v916 = vsel %vm914, 1, 0
    %v917 = vsel %vm915, 1, 0
    %vm918 = vcmp.eq.s32.totalorder %v916, 1
    %vm919 = vcmp.eq.s32.totalorder %v917, 1
    %vm920 = vmand %vm913, %vm918
    %vm921 = vmand %vm913, %vm919
    %vm922 = vcmp.le.s32.totalorder %v879, %v905
    %vm923 = vcmp.le.s32.totalorder %v893, %v905
    %v924 = vsel %vm922, 1, 0
    %v925 = vsel %vm923, 1, 0
    %vm926 = vcmp.eq.s32.totalorder %v924, 1
    %vm927 = vcmp.eq.s32.totalorder %v925, 1
    %vm928 = vmand %vm920, %vm926
    %vm929 = vmand %vm921, %vm927
    %v930 = vsel %vm928, %v905, %v898
    %v931 = vsel %vm929, %v905, %v901
    %v932 = vcvt.s32.f32 %v930
    %v933 = vcvt.s32.f32 %v931
    %v934 = vmax.f32 %v932, 1.0
    %v935 = vmax.f32 %v933, 1.0
    %v936 = vrcp.pop %v934
    %v937 = vmul.f32 -4.0, %v936
    %v938 = vrcp.pop %v935
    %v939 = vmul.f32 -4.0, %v938
    %v940 = vmul.f32 %v937, 1.442695
    %v941 = vpow.pop %v940
    %v942 = vmul.f32 %v939, 1.442695
    %v943 = vpow.pop %v942
    %v944 = vsub.f32 1.0, %v941
    %v945 = vsub.f32 1.0, %v943
    %vm946 = vmor %vm911, %vm928
    %vm947 = vmor %vm912, %vm929
    %v948 = vsel %vm946, %v944, 0.0
    %v949 = vsel %vm947, %v945, 0.0
    %vm950 = vcmp.eq.s32.totalorder %v857, %v879
    %vm951 = vcmp.eq.s32.totalorder %v857, %v893
    %v952 = vsel %vm950, 1.0, %v948
    %v953 = vsel %vm951, 1.0, %v949
    %v954 = vmul.f32 %v952, %v850
    %v955 = vmul.f32 %v953, %v853
    %v956 = vpack.c.bf16 %v955, %v954
    %v957 = vld [vmem:[#allocation9] sm:$0xf]
    %v958 = vld [vmem:[#allocation9 + $0x4] sm:$0xf]
    %v959 = vld [vmem:[#allocation9 + $0x8] sm:$0xf]
    %v960 = vld [vmem:[#allocation9 + $0xc] sm:$0xf]
    %v961 = vld [vmem:[#allocation9 + $0x10] sm:$0xf]
    %v962 = vld [vmem:[#allocation9 + $0x14] sm:$0xf]
    %v963 = vld [vmem:[#allocation9 + $0x18] sm:$0xf]
    %v964 = vld [vmem:[#allocation9 + $0x1c] sm:$0xf]
    %v965 = vld [vmem:[#allocation9 + $0x20] sm:$0xf]
    %v966 = vld [vmem:[#allocation9 + $0x24] sm:$0xf]
    %v967 = vld [vmem:[#allocation9 + $0x28] sm:$0xf]
    %v968 = vld [vmem:[#allocation9 + $0x2c] sm:$0xf]
    %v969 = vld [vmem:[#allocation9 + $0x30] sm:$0xf]
    %v970 = vld [vmem:[#allocation9 + $0x34] sm:$0xf]
    %v971 = vld [vmem:[#allocation9 + $0x38] sm:$0xf]
    %v972 = vld [vmem:[#allocation9 + $0x3c] sm:$0xf]
    %v973 = vld [vmem:[%s5] sm:$0x1]
    %v975 = vlaneseq
    %v976 = vshrl.u32 %v975, 7
    %v977 = vsub.s32 0, %v976
    %v978 = vrot.slane %v973, %v977
    %v996 = vunpack.c.l.b16 %v957
    %v997 = vunpack.c.l.b16 %v958
    %v998 = vunpack.c.l.b16 %v959
    %v999 = vunpack.c.l.b16 %v960
    %v1000 = vunpack.c.l.b16 %v961
    %v1001 = vunpack.c.l.b16 %v962
    %v1002 = vunpack.c.l.b16 %v963
    %v1003 = vunpack.c.l.b16 %v964
    %v1004 = vunpack.c.l.b16 %v965
    %v1005 = vunpack.c.l.b16 %v966
    %v1006 = vunpack.c.l.b16 %v967
    %v1007 = vunpack.c.l.b16 %v968
    %v1008 = vunpack.c.l.b16 %v969
    %v1009 = vunpack.c.l.b16 %v970
    %v1010 = vunpack.c.l.b16 %v971
    %v1011 = vunpack.c.l.b16 %v972
    %v1012 = vpack.c.b16 %v997, %v996
    %v1013 = vpack.c.b16 %v999, %v998
    %v1014 = vpack.c.b16 %v1001, %v1000
    %v1015 = vpack.c.b16 %v1003, %v1002
    %v1016 = vpack.c.b16 %v1005, %v1004
    %v1017 = vpack.c.b16 %v1007, %v1006
    %v1018 = vpack.c.b16 %v1009, %v1008
    %v1019 = vpack.c.b16 %v1011, %v1010
    %1028 = vmatprep.subr.bf16.mxu0 0
    %1029 = vmatpush1.bf16.msra.mxu0 %v1012
    %1030 = vmatprep.subr.bf16.mxu0 0
    %1031 = vmatpush1.bf16.msra.mxu0 %v1013
    %1032 = vmatprep.subr.bf16.mxu0 0
    %1033 = vmatpush1.bf16.msra.mxu0 %v1014
    %1034 = vmatprep.subr.bf16.mxu0 0
    %1035 = vmatpush1.bf16.msra.mxu0 %v1015
    %1036 = vmatprep.subr.bf16.mxu0 0
    %1037 = vmatpush1.bf16.msra.mxu0 %v1016
    %1038 = vmatprep.subr.bf16.mxu0 0
    %1039 = vmatpush1.bf16.msra.mxu0 %v1017
    %1040 = vmatprep.subr.bf16.mxu0 0
    %1041 = vmatpush1.bf16.msra.mxu0 %v1018
    %1042 = vmatprep.subr.bf16.mxu0 0
    %1043 = vmatpush1.bf16.msra.mxu0 %v1019
    %1044 = vmatprep.subr.bf16.mxu0 0
    %1045 = vmatpush1.bf16.msra.mxu0 0
    %1046 = vmatprep.subr.bf16.mxu0 0
    %1047 = vmatpush1.bf16.msra.mxu0 0
    %1048 = vmatprep.subr.bf16.mxu0 0
    %1049 = vmatpush1.bf16.msra.mxu0 0
    %1050 = vmatprep.subr.bf16.mxu0 0
    %1051 = vmatpush1.bf16.msra.mxu0 0
    %1052 = vmatprep.subr.bf16.mxu0 0
    %1053 = vmatpush1.bf16.msra.mxu0 0
    %1054 = vmatprep.subr.bf16.mxu0 0
    %1055 = vmatpush1.bf16.msra.mxu0 0
    %1056 = vmatprep.subr.bf16.mxu0 0
    %1057 = vmatpush1.bf16.msra.mxu0 0
    %1058 = vmatprep.subr.bf16.mxu0 0
    %1059 = vmatpush1.bf16.msra.mxu0 0
    %1060 = vmatprep.mubr.bf16.mxu0 0
    %1061 = vmatmul.mubr.bf16.gmra.mrb[0].mxu0 %v956
    %v1062 = vpop.f32.mrb[0].mxu0
    %v1063 = vadd.f32 %v978, %v1062
    %v1064 = vpop.f32.mrb[0].mxu0
    %v1065 = vpop.f32.mrb[0].mxu0
    %v1066 = vadd.f32 %v978, %v1065
    %v1067 = vpop.f32.mrb[0].mxu0
    %1068 = vdwg.mxu0
    %v1069 = vmax.f32 %v1063, 0.0
    %v1070 = vmax.f32 %v1066, 0.0
    %v1071 = vpack.c.bf16 %v1070, %v1069
    %v1072 = vld [vmem:[#allocation10] sm:$0xf]
    %v1073 = vld [vmem:[#allocation10 + $0x4] sm:$0xf]
    %v1074 = vld [vmem:[#allocation10 + $0x8] sm:$0xf]
    %v1075 = vld [vmem:[#allocation10 + $0xc] sm:$0xf]
    %v1076 = vld [vmem:[#allocation10 + $0x10] sm:$0xf]
    %v1077 = vld [vmem:[#allocation10 + $0x14] sm:$0xf]
    %v1078 = vld [vmem:[#allocation10 + $0x18] sm:$0xf]
    %v1079 = vld [vmem:[#allocation10 + $0x1c] sm:$0xf]
    %v1080 = vld [vmem:[#allocation10 + $0x20] sm:$0xf]
    %v1081 = vld [vmem:[#allocation10 + $0x24] sm:$0xf]
    %v1082 = vld [vmem:[#allocation10 + $0x28] sm:$0xf]
    %v1083 = vld [vmem:[#allocation10 + $0x2c] sm:$0xf]
    %v1084 = vld [vmem:[#allocation10 + $0x30] sm:$0xf]
    %v1085 = vld [vmem:[#allocation10 + $0x34] sm:$0xf]
    %v1086 = vld [vmem:[#allocation10 + $0x38] sm:$0xf]
    %v1087 = vld [vmem:[#allocation10 + $0x3c] sm:$0xf]
    %v1088 = vld [vmem:[%s7] sm:$0x1]
    %v1090 = vlaneseq
    %v1091 = vshrl.u32 %v1090, 7
    %v1092 = vsub.s32 0, %v1091
    %v1093 = vrot.slane %v1088, %v1092
    %v1111 = vunpack.c.l.b16 %v1072
    %v1112 = vunpack.c.l.b16 %v1073
    %v1113 = vunpack.c.l.b16 %v1074
    %v1114 = vunpack.c.l.b16 %v1075
    %v1115 = vunpack.c.l.b16 %v1076
    %v1116 = vunpack.c.l.b16 %v1077
    %v1117 = vunpack.c.l.b16 %v1078
    %v1118 = vunpack.c.l.b16 %v1079
    %v1119 = vunpack.c.l.b16 %v1080
    %v1120 = vunpack.c.l.b16 %v1081
    %v1121 = vunpack.c.l.b16 %v1082
    %v1122 = vunpack.c.l.b16 %v1083
    %v1123 = vunpack.c.l.b16 %v1084
    %v1124 = vunpack.c.l.b16 %v1085
    %v1125 = vunpack.c.l.b16 %v1086
    %v1126 = vunpack.c.l.b16 %v1087
    %v1127 = vpack.c.b16 %v1112, %v1111
    %v1128 = vpack.c.b16 %v1114, %v1113
    %v1129 = vpack.c.b16 %v1116, %v1115
    %v1130 = vpack.c.b16 %v1118, %v1117
    %v1131 = vpack.c.b16 %v1120, %v1119
    %v1132 = vpack.c.b16 %v1122, %v1121
    %v1133 = vpack.c.b16 %v1124, %v1123
    %v1134 = vpack.c.b16 %v1126, %v1125
    %1143 = vmatprep.subr.bf16.mxu0 0
    %1144 = vmatpush1.bf16.msra.mxu0 %v1127
    %1145 = vmatprep.subr.bf16.mxu0 0
    %1146 = vmatpush1.bf16.msra.mxu0 %v1128
    %1147 = vmatprep.subr.bf16.mxu0 0
    %1148 = vmatpush1.bf16.msra.mxu0 %v1129
    %1149 = vmatprep.subr.bf16.mxu0 0
    %1150 = vmatpush1.bf16.msra.mxu0 %v1130
    %1151 = vmatprep.subr.bf16.mxu0 0
    %1152 = vmatpush1.bf16.msra.mxu0 %v1131
    %1153 = vmatprep.subr.bf16.mxu0 0
    %1154 = vmatpush1.bf16.msra.mxu0 %v1132
    %1155 = vmatprep.subr.bf16.mxu0 0
    %1156 = vmatpush1.bf16.msra.mxu0 %v1133
    %1157 = vmatprep.subr.bf16.mxu0 0
    %1158 = vmatpush1.bf16.msra.mxu0 %v1134
    %1159 = vmatprep.subr.bf16.mxu0 0
    %1160 = vmatpush1.bf16.msra.mxu0 0
    %1161 = vmatprep.subr.bf16.mxu0 0
    %1162 = vmatpush1.bf16.msra.mxu0 0
    %1163 = vmatprep.subr.bf16.mxu0 0
    %1164 = vmatpush1.bf16.msra.mxu0 0
    %1165 = vmatprep.subr.bf16.mxu0 0
    %1166 = vmatpush1.bf16.msra.mxu0 0
    %1167 = vmatprep.subr.bf16.mxu0 0
    %1168 = vmatpush1.bf16.msra.mxu0 0
    %1169 = vmatprep.subr.bf16.mxu0 0
    %1170 = vmatpush1.bf16.msra.mxu0 0
    %1171 = vmatprep.subr.bf16.mxu0 0
    %1172 = vmatpush1.bf16.msra.mxu0 0
    %1173 = vmatprep.subr.bf16.mxu0 0
    %1174 = vmatpush1.bf16.msra.mxu0 0
    %1175 = vmatprep.mubr.bf16.mxu0 0
    %1176 = vmatmul.mubr.bf16.gmra.mrb[0].mxu0 %v1071
    %v1177 = vpop.f32.mrb[0].mxu0
    %v1178 = vadd.f32 %v1093, %v1177
    %v1179 = vpop.f32.mrb[0].mxu0
    %v1180 = vpop.f32.mrb[0].mxu0
    %v1181 = vadd.f32 %v1093, %v1180
    %v1182 = vpop.f32.mrb[0].mxu0
    %1183 = vdwg.mxu0
    %v1184 = vmax.f32 %v1178, 0.0
    %v1185 = vmax.f32 %v1181, 0.0
    %v1186 = vpack.c.bf16 %v1185, %v1184
    %v1187 = vld [vmem:[#allocation12] sm:$0xf]
    %v1188 = vld [vmem:[#allocation12 + $0x4] sm:$0xf]
    %v1189 = vld [vmem:[#allocation12 + $0x8] sm:$0xf]
    %v1190 = vld [vmem:[#allocation12 + $0xc] sm:$0xf]
    %v1191 = vld [vmem:[#allocation12 + $0x10] sm:$0xf]
    %v1192 = vld [vmem:[#allocation12 + $0x14] sm:$0xf]
    %v1193 = vld [vmem:[#allocation12 + $0x18] sm:$0xf]
    %v1194 = vld [vmem:[#allocation12 + $0x1c] sm:$0xf]
    %v1195 = vld [vmem:[#allocation12 + $0x20] sm:$0xf]
    %v1196 = vld [vmem:[#allocation12 + $0x24] sm:$0xf]
    %v1197 = vld [vmem:[#allocation12 + $0x28] sm:$0xf]
    %v1198 = vld [vmem:[#allocation12 + $0x2c] sm:$0xf]
    %v1199 = vld [vmem:[#allocation12 + $0x30] sm:$0xf]
    %v1200 = vld [vmem:[#allocation12 + $0x34] sm:$0xf]
    %v1201 = vld [vmem:[#allocation12 + $0x38] sm:$0xf]
    %v1202 = vld [vmem:[#allocation12 + $0x3c] sm:$0xf]
    %v1203 = vld [vmem:[%s9] sm:$0x1]
    %v1205 = vlaneseq
    %v1206 = vshrl.u32 %v1205, 7
    %v1207 = vsub.s32 0, %v1206
    %v1208 = vrot.slane %v1203, %v1207
    %v1226 = vunpack.c.l.b16 %v1187
    %v1227 = vunpack.c.l.b16 %v1188
    %v1228 = vunpack.c.l.b16 %v1189
    %v1229 = vunpack.c.l.b16 %v1190
    %v1230 = vunpack.c.l.b16 %v1191
    %v1231 = vunpack.c.l.b16 %v1192
    %v1232 = vunpack.c.l.b16 %v1193
    %v1233 = vunpack.c.l.b16 %v1194
    %v1234 = vunpack.c.l.b16 %v1195
    %v1235 = vunpack.c.l.b16 %v1196
    %v1236 = vunpack.c.l.b16 %v1197
    %v1237 = vunpack.c.l.b16 %v1198
    %v1238 = vunpack.c.l.b16 %v1199
    %v1239 = vunpack.c.l.b16 %v1200
    %v1240 = vunpack.c.l.b16 %v1201
    %v1241 = vunpack.c.l.b16 %v1202
    %v1242 = vpack.c.b16 %v1227, %v1226
    %v1243 = vpack.c.b16 %v1229, %v1228
    %v1244 = vpack.c.b16 %v1231, %v1230
    %v1245 = vpack.c.b16 %v1233, %v1232
    %v1246 = vpack.c.b16 %v1235, %v1234
    %v1247 = vpack.c.b16 %v1237, %v1236
    %v1248 = vpack.c.b16 %v1239, %v1238
    %v1249 = vpack.c.b16 %v1241, %v1240
    %1258 = vmatprep.subr.bf16.mxu0 0
    %1259 = vmatpush1.bf16.msra.mxu0 %v1242
    %1260 = vmatprep.subr.bf16.mxu0 0
    %1261 = vmatpush1.bf16.msra.mxu0 %v1243
    %1262 = vmatprep.subr.bf16.mxu0 0
    %1263 = vmatpush1.bf16.msra.mxu0 %v1244
    %1264 = vmatprep.subr.bf16.mxu0 0
    %1265 = vmatpush1.bf16.msra.mxu0 %v1245
    %1266 = vmatprep.subr.bf16.mxu0 0
    %1267 = vmatpush1.bf16.msra.mxu0 %v1246
    %1268 = vmatprep.subr.bf16.mxu0 0
    %1269 = vmatpush1.bf16.msra.mxu0 %v1247
    %1270 = vmatprep.subr.bf16.mxu0 0
    %1271 = vmatpush1.bf16.msra.mxu0 %v1248
    %1272 = vmatprep.subr.bf16.mxu0 0
    %1273 = vmatpush1.bf16.msra.mxu0 %v1249
    %1274 = vmatprep.subr.bf16.mxu0 0
    %1275 = vmatpush1.bf16.msra.mxu0 0
    %1276 = vmatprep.subr.bf16.mxu0 0
    %1277 = vmatpush1.bf16.msra.mxu0 0
    %1278 = vmatprep.subr.bf16.mxu0 0
    %1279 = vmatpush1.bf16.msra.mxu0 0
    %1280 = vmatprep.subr.bf16.mxu0 0
    %1281 = vmatpush1.bf16.msra.mxu0 0
    %1282 = vmatprep.subr.bf16.mxu0 0
    %1283 = vmatpush1.bf16.msra.mxu0 0
    %1284 = vmatprep.subr.bf16.mxu0 0
    %1285 = vmatpush1.bf16.msra.mxu0 0
    %1286 = vmatprep.subr.bf16.mxu0 0
    %1287 = vmatpush1.bf16.msra.mxu0 0
    %1288 = vmatprep.subr.bf16.mxu0 0
    %1289 = vmatpush1.bf16.msra.mxu0 0
    %1290 = vmatprep.mubr.bf16.mxu0 0
    %1291 = vmatmul.mubr.bf16.gmra.mrb[0].mxu0 %v1186
    %v1292 = vpop.f32.mrb[0].mxu0
    %v1293 = vadd.f32 %v1208, %v1292
    %v1294 = vpop.f32.mrb[0].mxu0
    %v1295 = vpop.f32.mrb[0].mxu0
    %v1296 = vadd.f32 %v1208, %v1295
    %v1297 = vpop.f32.mrb[0].mxu0
    %1298 = vdwg.mxu0
    %v1299 = vmax.f32 %v1293, 0.0
    %v1300 = vmax.f32 %v1296, 0.0
    %v1301 = vpack.c.bf16 %v1300, %v1299
    %v1302 = vld [vmem:[#allocation13] sm:$0xf]
    %v1303 = vld [vmem:[#allocation13 + $0x4] sm:$0xf]
    %v1304 = vld [vmem:[#allocation13 + $0x8] sm:$0xf]
    %v1305 = vld [vmem:[#allocation13 + $0xc] sm:$0xf]
    %v1306 = vld [vmem:[#allocation13 + $0x10] sm:$0xf]
    %v1307 = vld [vmem:[#allocation13 + $0x14] sm:$0xf]
    %v1308 = vld [vmem:[#allocation13 + $0x18] sm:$0xf]
    %v1309 = vld [vmem:[#allocation13 + $0x1c] sm:$0xf]
    %v1310 = vld [vmem:[#allocation13 + $0x20] sm:$0xf]
    %v1311 = vld [vmem:[#allocation13 + $0x24] sm:$0xf]
    %v1312 = vld [vmem:[#allocation13 + $0x28] sm:$0xf]
    %v1313 = vld [vmem:[#allocation13 + $0x2c] sm:$0xf]
    %v1314 = vld [vmem:[#allocation13 + $0x30] sm:$0xf]
    %v1315 = vld [vmem:[#allocation13 + $0x34] sm:$0xf]
    %v1316 = vld [vmem:[#allocation13 + $0x38] sm:$0xf]
    %v1317 = vld [vmem:[#allocation13 + $0x3c] sm:$0xf]
    %v1318 = vld [vmem:[%s11] sm:$0x1]
    %v1320 = vlaneseq
    %v1321 = vshrl.u32 %v1320, 7
    %v1322 = vsub.s32 0, %v1321
    %v1323 = vrot.slane %v1318, %v1322
    %v1341 = vunpack.c.l.b16 %v1302
    %v1342 = vunpack.c.l.b16 %v1303
    %v1343 = vunpack.c.l.b16 %v1304
    %v1344 = vunpack.c.l.b16 %v1305
    %v1345 = vunpack.c.l.b16 %v1306
    %v1346 = vunpack.c.l.b16 %v1307
    %v1347 = vunpack.c.l.b16 %v1308
    %v1348 = vunpack.c.l.b16 %v1309
    %v1349 = vunpack.c.l.b16 %v1310
    %v1350 = vunpack.c.l.b16 %v1311
    %v1351 = vunpack.c.l.b16 %v1312
    %v1352 = vunpack.c.l.b16 %v1313
    %v1353 = vunpack.c.l.b16 %v1314
    %v1354 = vunpack.c.l.b16 %v1315
    %v1355 = vunpack.c.l.b16 %v1316
    %v1356 = vunpack.c.l.b16 %v1317
    %v1357 = vpack.c.b16 %v1342, %v1341
    %v1358 = vpack.c.b16 %v1344, %v1343
    %v1359 = vpack.c.b16 %v1346, %v1345
    %v1360 = vpack.c.b16 %v1348, %v1347
    %v1361 = vpack.c.b16 %v1350, %v1349
    %v1362 = vpack.c.b16 %v1352, %v1351
    %v1363 = vpack.c.b16 %v1354, %v1353
    %v1364 = vpack.c.b16 %v1356, %v1355
    %1373 = vmatprep.subr.bf16.mxu0 0
    %1374 = vmatpush1.bf16.msra.mxu0 %v1357
    %1375 = vmatprep.subr.bf16.mxu0 0
    %1376 = vmatpush1.bf16.msra.mxu0 %v1358
    %1377 = vmatprep.subr.bf16.mxu0 0
    %1378 = vmatpush1.bf16.msra.mxu0 %v1359
    %1379 = vmatprep.subr.bf16.mxu0 0
    %1380 = vmatpush1.bf16.msra.mxu0 %v1360
    %1381 = vmatprep.subr.bf16.mxu0 0
    %1382 = vmatpush1.bf16.msra.mxu0 %v1361
    %1383 = vmatprep.subr.bf16.mxu0 0
    %1384 = vmatpush1.bf16.msra.mxu0 %v1362
    %1385 = vmatprep.subr.bf16.mxu0 0
    %1386 = vmatpush1.bf16.msra.mxu0 %v1363
    %1387 = vmatprep.subr.bf16.mxu0 0
    %1388 = vmatpush1.bf16.msra.mxu0 %v1364
    %1389 = vmatprep.subr.bf16.mxu0 0
    %1390 = vmatpush1.bf16.msra.mxu0 0
    %1391 = vmatprep.subr.bf16.mxu0 0
    %1392 = vmatpush1.bf16.msra.mxu0 0
    %1393 = vmatprep.subr.bf16.mxu0 0
    %1394 = vmatpush1.bf16.msra.mxu0 0
    %1395 = vmatprep.subr.bf16.mxu0 0
    %1396 = vmatpush1.bf16.msra.mxu0 0
    %1397 = vmatprep.subr.bf16.mxu0 0
    %1398 = vmatpush1.bf16.msra.mxu0 0
    %1399 = vmatprep.subr.bf16.mxu0 0
    %1400 = vmatpush1.bf16.msra.mxu0 0
    %1401 = vmatprep.subr.bf16.mxu0 0
    %1402 = vmatpush1.bf16.msra.mxu0 0
    %1403 = vmatprep.subr.bf16.mxu0 0
    %1404 = vmatpush1.bf16.msra.mxu0 0
    %1405 = vmatprep.mubr.bf16.mxu0 0
    %1406 = vmatmul.mubr.bf16.gmra.mrb[0].mxu0 %v1301
    %v1407 = vpop.f32.mrb[0].mxu0
    %v1408 = vadd.f32 %v1323, %v1407
    %v1409 = vpop.f32.mrb[0].mxu0
    %v1410 = vpop.f32.mrb[0].mxu0
    %v1411 = vadd.f32 %v1323, %v1410
    %v1412 = vpop.f32.mrb[0].mxu0
    %1413 = vdwg.mxu0
    %1414 = vst [vmem:[#allocation15] sm:$0xff] %v1408
    %1415 = vst [vmem:[#allocation15 + $0x8] sm:$0xff] %v1411
    // Predicated region
    $region70: #{tpu_custom_call.1} parent=1 // pred_check
      _
    $region71: #{tpu_custom_call.1} parent=1 // pred_check_branch
      %1417 = sbr.rel (0) target = $region73
    $region72: #{tpu_custom_call.1} parent=1 // pred_region
      %s1419 = ssub.s32 256, 256
      %1420 = vsyncadd [#allocation6], %s1419
      %s1421 = sshll.u32 [#allocation15], 4
      %s1422 = int_to_ptr.vmem [resolvable:$true] %s1421
      %1427 = dma.vmem_to_hbm [thread:$0]  %s1422, 256, %s12, [#allocation6], 128, 128, 8
    $region73: #{tpu_custom_call.1} parent=1 // pred_fallthru
      _
    // Predicated region
    $region74: #{tpu_custom_call.1} parent=1 // pred_check
      _
    $region75: #{tpu_custom_call.1} parent=1 // pred_check_branch
      %1429 = sbr.rel (0) target = $region77
    $region76: #{tpu_custom_call.1} parent=1 // pred_region
      %1430 = dma.done [#allocation6], 256
    $region77: #{tpu_custom_call.1} parent=1 // pred_fallthru
      _
    %1431 = vsyncpa [#allocation5], 1
    %1432 = vsyncpa [#allocation8], 1
    %1433 = vsyncpa [#allocation11], 1
    %1434 = vsyncpa [#allocation14], 1
    %1435 = vsyncpa [#allocation6], 1

</llo_original>
